<compile_context>
chip_gen: v6e
topology: v6e:2x2x1
jax: 0.10.0
libtpu: 0.0.40
codegen_flags: <defaults>
</compile_context>

<pallas_src>
import functools
from types import SimpleNamespace

import jax
import jax.numpy as jnp
from jax.experimental import pallas as pl
from jax.experimental.pallas import tpu as pltpu


# ----------------------------- helpers -----------------------------

def _round_up(x, m):
    return (x + m - 1) // m * m


def _pick_hw_tile(hw, max_tile=512):
    """Lane-dense (multiple-of-128) HW tile, capped at max_tile.

    512-wide tiles sit at the measured ~85% HBM-roofline plateau; with bf16 feat traffic
    max_tile can be raised toward 1024-2048 on v7x (3.2 TB/s) to amortize per-step cost."""
    return min(max_tile, _round_up(hw, 128))


# ----------------------------- fused backbone kernel -----------------------------
# model stub (1x1 conv + ReLU + GAP) chained with bifpn stub (1x1 conv + ReLU + GAP).

def _backbone_kernel(x_ref, w1_ref, b1_ref, w2_ref, b2_ref,
                     feat1_ref, feat2_ref, pooled1_ref, pooled2_ref,
                     acc1_ref, acc2_ref, *, inv_hw, hw, t_hw, need_mask):
    t = pl.program_id(1)

    @pl.when(t == 0)
    def _():
        acc1_ref[...] = jnp.zeros_like(acc1_ref)
        acc2_ref[...] = jnp.zeros_like(acc2_ref)

    # conv1: 1x1 conv as (Cout, Cin) @ (Cin, T_hw) pixel matmul (bf16 in, f32 acc).
    # HW sits on lanes -> the bf16 feat store is an unmasked, lane-dense vst.
    y = jnp.dot(w1_ref[...], x_ref[0], preferred_element_type=jnp.float32)
    y = jnp.maximum(y + b1_ref[...], 0.0)                           # (Cout, T_hw) f32
    y_bf = y.astype(jnp.bfloat16)
    feat1_ref[0] = y_bf

    # conv2 (bifpn stub) chained on the in-register tile: feat1 is never re-read from HBM.
    z = jnp.dot(w2_ref[...], y_bf, preferred_element_type=jnp.float32)
    z = jnp.maximum(z + b2_ref[...], 0.0)                           # (Cw, T_hw) f32
    feat2_ref[0] = z.astype(jnp.bfloat16)

    if need_mask:
        # relu(0 @ W + b) = relu(b) != 0, so padded HW lanes must not pollute the GAP.
        col = jax.lax.broadcasted_iota(jnp.int32, y.shape, 1)
        y = jnp.where((t * t_hw + col) < hw, y, 0.0)
        col2 = jax.lax.broadcasted_iota(jnp.int32, z.shape, 1)
        z = jnp.where((t * t_hw + col2) < hw, z, 0.0)

    acc1_ref[...] += jnp.sum(y, axis=1, keepdims=True)              # (Cout, 1)
    acc2_ref[...] += jnp.sum(z, axis=1, keepdims=True)              # (Cw, 1)

    @pl.when(t == pl.num_programs(1) - 1)
    def _():
        pooled1_ref[0] = acc1_ref[...] * inv_hw
        pooled2_ref[0] = acc2_ref[...] * inv_hw


def pallas_fused_backbone(x_nchw, w1, b1, w2, b2, max_tile=512):
    """Fused: feat1 = relu(conv1x1(x)); feat2 = relu(conv1x1(feat1)); GAP of both.

    x_nchw: (N, Cin, H, W) f32.  w1: (Cout, Cin), w2: (Cw, Cout) (PyTorch conv layout).
    Returns feat1 (N, Cout, H, W) bf16, feat2 (N, Cw, H, W) bf16,
            pooled1 (N, Cout) f32, pooled2 (N, Cw) f32  (== adaptive_avg_pool2d((1,1)))."""
    N, Cin, H, W = x_nchw.shape
    HW = H * W
    Cout = w1.shape[0]
    Cw = w2.shape[0]

    T_hw = _pick_hw_tile(HW, max_tile)
    HWpad = _round_up(HW, T_hw)
    need_mask = HWpad != HW

    x = x_nchw.reshape(N, Cin, HW).astype(jnp.bfloat16)
    if need_mask:
        x = jnp.pad(x, ((0, 0), (0, 0), (0, HWpad - HW)))
    w1b = w1.astype(jnp.bfloat16)
    w2b = w2.astype(jnp.bfloat16)
    b1c = b1.reshape(Cout, 1).astype(jnp.float32)
    b2c = b2.reshape(Cw, 1).astype(jnp.float32)

    # Explicit VMEM budget (double-buffered bf16 x/feat1/feat2 tiles + weights + accs);
    # only override the scoped default when a large config would exceed it (v7x: 64 MiB/TC).
    est = 2 * 2 * T_hw * (Cin + Cout + Cw) + 2 * 2 * (Cout * Cin + Cw * Cout) \
        + 4 * 128 * 2 * (Cout + Cw)
    vmem_limit = int(est * 1.5) if est * 1.5 > (32 << 20) else None

    # TODO(synk): if the x-input DMA shows up exposed on v5e, add
    # pipeline_mode=pl.Buffered(3) on the x BlockSpec.
    feat1, feat2, pooled1, pooled2 = pl.pallas_call(
        functools.partial(_backbone_kernel, inv_hw=1.0 / HW, hw=HW, t_hw=T_hw,
                          need_mask=need_mask),
        out_shape=(jax.ShapeDtypeStruct((N, Cout, HWpad), jnp.bfloat16),
                   jax.ShapeDtypeStruct((N, Cw, HWpad), jnp.bfloat16),
                   jax.ShapeDtypeStruct((N, Cout, 1), jnp.float32),
                   jax.ShapeDtypeStruct((N, Cw, 1), jnp.float32)),
        grid=(N, HWpad // T_hw),
        in_specs=[pl.BlockSpec((1, Cin, T_hw), lambda n, t: (n, 0, t)),
                  pl.BlockSpec((Cout, Cin), lambda n, t: (0, 0)),
                  pl.BlockSpec((Cout, 1), lambda n, t: (0, 0)),
                  pl.BlockSpec((Cw, Cout), lambda n, t: (0, 0)),
                  pl.BlockSpec((Cw, 1), lambda n, t: (0, 0))],
        out_specs=(pl.BlockSpec((1, Cout, T_hw), lambda n, t: (n, 0, t)),
                   pl.BlockSpec((1, Cw, T_hw), lambda n, t: (n, 0, t)),
                   pl.BlockSpec((1, Cout, 1), lambda n, t: (n, 0, 0)),
                   pl.BlockSpec((1, Cw, 1), lambda n, t: (n, 0, 0))),
        scratch_shapes=[pltpu.VMEM((Cout, 1), jnp.float32),
                        pltpu.VMEM((Cw, 1), jnp.float32)],
        compiler_params=pltpu.CompilerParams(
            dimension_semantics=("parallel", "arbitrary"),
            vmem_limit_bytes=vmem_limit),
    )(x, w1b, b1c, w2b, b2c)

    if need_mask:
        feat1 = feat1[:, :, :HW]
        feat2 = feat2[:, :, :HW]
    feat1 = feat1.reshape(N, Cout, H, W)
    feat2 = feat2.reshape(N, Cw, H, W)
    return feat1, feat2, pooled1[:, :, 0], pooled2[:, :, 0]


# ----------------------------- fused tail kernel -----------------------------
# classifiers + fc1 + fc2 + strided aux-selection/mean + all six scalar losses in ONE launch.

def _ce_mean(logits, tgt):
    # nn.CrossEntropyLoss() with integer class targets, mean reduction.
    B, C = logits.shape
    m = jnp.max(logits, axis=1, keepdims=True)
    lse = m + jnp.log(jnp.sum(jnp.exp(logits - m), axis=1, keepdims=True))
    col = jax.lax.broadcasted_iota(jnp.int32, (B, C), 1)
    tgt_logit = jnp.sum(jnp.where(col == tgt, logits, 0.0), axis=1, keepdims=True)
    return jnp.sum(lse - tgt_logit, axis=0, keepdims=True) * (1.0 / B)        # (1, 1)


def _log_softmax(z):
    m = jnp.max(z, axis=1, keepdims=True)
    return z - m - jnp.log(jnp.sum(jnp.exp(z - m), axis=1, keepdims=True))


def _kd(y_s, y_t, T):
    # DistillKL: KL(softmax(y_t/T) || softmax(y_s/T)) * T^2, sum / batch.
    B = y_s.shape[0]
    log_p_s = _log_softmax(y_s * (1.0 / T))
    log_p_t = _log_softmax(y_t * (1.0 / T))
    p_t = jnp.exp(log_p_t)
    per_row = jnp.sum(p_t * (log_p_t - log_p_s), axis=1, keepdims=True)
    return jnp.sum(per_row, axis=0, keepdims=True) * (T * T / B)              # (1, 1)


def _sel_mean(aux, bs, nc):
    # torch.stack([aux[i::4, i::4] for i in range(4)], 1).mean(1) as a masked sandwich
    # of two tiny selector matmuls (no strided gathers inside the kernel).
    fb, fc = aux.shape                                    # (4*bs, 4*nc)
    r = jax.lax.broadcasted_iota(jnp.int32, (fb, fc), 0)
    c = jax.lax.broadcasted_iota(jnp.int32, (fb, fc), 1)
    d = jnp.where((r & 3) == (c & 3), aux, 0.0)           # keep matching rotation index
    sr = jax.lax.broadcasted_iota(jnp.int32, (bs, fb), 0)
    rr = jax.lax.broadcasted_iota(jnp.int32, (bs, fb), 1)
    p_row = ((rr >> 2) == sr).astype(jnp.float32)         # (bs, 4bs): sum over rotations
    cr = jax.lax.broadcasted_iota(jnp.int32, (fc, nc), 0)
    cc = jax.lax.broadcasted_iota(jnp.int32, (fc, nc), 1)
    p_col = ((cr >> 2) == cc).astype(jnp.float32)         # (4nc, nc): sum over class slots
    sel = jnp.dot(jnp.dot(p_row, d, preferred_element_type=jnp.float32), p_col,
                  preferred_element_type=jnp.float32)
    return sel * 0.25


def _tail_kernel(p1h_ref, p1r_ref, p2h_ref, p2r_ref,
                 cw1_ref, cb1_ref, cw2_ref, cb2_ref,
                 fw1_ref, fb1_ref, fw2_ref, fb2_ref,
                 tgt_ref, auxtgt_ref,
                 out_ref, biout_ref, auxsel_ref, biauxsel_ref, loss_ref,
                 *, T, aux_lamb, num_classes):
    bs = out_ref.shape[0]

    outputs = jnp.dot(p1h_ref[...], cw1_ref[...],
                      preferred_element_type=jnp.float32) + cb1_ref[...]      # (bs, nc)
    bi_outputs = jnp.dot(p2h_ref[...], cw2_ref[...],
                         preferred_element_type=jnp.float32) + cb2_ref[...]   # (bs, nc)
    aux = jnp.dot(p1r_ref[...], fw1_ref[...],
                  preferred_element_type=jnp.float32) + fb1_ref[...]          # (4bs, 4nc)
    biaux = jnp.dot(p2r_ref[...], fw2_ref[...],
                    preferred_element_type=jnp.float32) + fb2_ref[...]        # (4bs, 4nc)

    aux_sel = _sel_mean(aux, bs, num_classes)                                 # (bs, nc)
    biaux_sel = _sel_mean(biaux, bs, num_classes)                             # (bs, nc)

    tgt = tgt_ref[...]
    auxtgt = auxtgt_ref[...]
    single_loss = _ce_mean(outputs, tgt) + _ce_mean(bi_outputs, tgt)
    joint_loss = _ce_mean(aux, auxtgt) + _ce_mean(biaux, auxtgt)
    sla_loss = _kd(outputs, aux_sel, T) + _kd(bi_outputs, biaux_sel, T)

    out_ref[...] = outputs
    biout_ref[...] = bi_outputs
    auxsel_ref[...] = aux_sel
    biauxsel_ref[...] = biaux_sel
    loss_ref[...] = single_loss + joint_loss + aux_lamb * sla_loss


def pallas_sla_tail(pooled1, pooled2, params, targets, aux_targets,
                    *, num_classes, T, aux_lamb):
    bs = targets.shape[0]
    nc = num_classes

    p1h, p1r = pooled1[:bs], pooled1[bs:]
    p2h, p2r = pooled2[:bs], pooled2[bs:]

    cw1 = jnp.transpose(params["m_cls_w"]).astype(jnp.float32)     # (Cout, nc)
    cb1 = params["m_cls_b"].reshape(1, nc).astype(jnp.float32)
    cw2 = jnp.transpose(params["b_cls_w"]).astype(jnp.float32)     # (Cw, nc)
    cb2 = params["b_cls_b"].reshape(1, nc).astype(jnp.float32)
    fw1 = jnp.transpose(params["fc1_w"]).astype(jnp.float32)       # (Cout, 4nc)
    fb1 = params["fc1_b"].reshape(1, 4 * nc).astype(jnp.float32)
    fw2 = jnp.transpose(params["fc2_w"]).astype(jnp.float32)       # (Cw, 4nc)
    fb2 = params["fc2_b"].reshape(1, 4 * nc).astype(jnp.float32)

    tgt = targets.astype(jnp.int32).reshape(bs, 1)
    atgt = aux_targets.astype(jnp.int32).reshape(4 * bs, 1)

    ins = [p1h, p1r, p2h, p2r, cw1, cb1, cw2, cb2, fw1, fb1, fw2, fb2, tgt, atgt]
    outputs, bi_outputs, aux_sel, biaux_sel, loss = pl.pallas_call(
        functools.partial(_tail_kernel, T=float(T), aux_lamb=float(aux_lamb),
                          num_classes=nc),
        out_shape=(jax.ShapeDtypeStruct((bs, nc), jnp.float32),
                   jax.ShapeDtypeStruct((bs, nc), jnp.float32),
                   jax.ShapeDtypeStruct((bs, nc), jnp.float32),
                   jax.ShapeDtypeStruct((bs, nc), jnp.float32),
                   jax.ShapeDtypeStruct((1, 1), jnp.float32)),
        grid=(1,),
        in_specs=[pl.BlockSpec(a.shape, lambda i: (0, 0)) for a in ins],
        out_specs=(pl.BlockSpec((bs, nc), lambda i: (0, 0)),
                   pl.BlockSpec((bs, nc), lambda i: (0, 0)),
                   pl.BlockSpec((bs, nc), lambda i: (0, 0)),
                   pl.BlockSpec((bs, nc), lambda i: (0, 0)),
                   pl.BlockSpec((1, 1), lambda i: (0, 0))),
    )(*ins)
    return outputs, bi_outputs, aux_sel, biaux_sel, loss[0, 0]


# ----------------------------- glue / stubs -----------------------------

def rotation(images):
    """torch rotation(): stacked rot90 k=0..3 over dims (2, 3), NCHW layout."""
    size = images.shape[1:]
    rots = jnp.stack([jnp.rot90(images, k, axes=(2, 3)) for k in range(4)], axis=1)
    return rots.reshape(-1, *size)


def make_params(key, args, in_channels):
    """Deterministic parameter init (synthetic stand-in, no checkpoint)."""
    C = args.network_channels[-1]
    Cw = C * args.width
    nc = args.num_classes
    ks = jax.random.split(key, 6)

    def lin(k, out_f, in_f):
        kw, kb = jax.random.split(k)
        w = jax.random.normal(kw, (out_f, in_f), jnp.float32) * (1.0 / jnp.sqrt(in_f))
        b = jax.random.normal(kb, (out_f,), jnp.float32) * 0.01
        return w, b

    p = {}
    # SLALoss-owned heads.
    p["fc1_w"], p["fc1_b"] = lin(ks[0], 4 * nc, C)        # nn.Linear(C, 4*num_classes)
    p["fc2_w"], p["fc2_b"] = lin(ks[1], 4 * nc, Cw)       # nn.Linear(C*width, 4*num_classes)
    # Stub backbone `model`: 1x1 conv -> feat, GAP -> classifier.
    p["m_conv_w"], p["m_conv_b"] = lin(ks[2], C, in_channels)
    p["m_cls_w"], p["m_cls_b"] = lin(ks[3], nc, C)
    # Stub `bifpn`: 1x1 conv widening -> bi_feat, GAP -> classifier.
    p["b_conv_w"], p["b_conv_b"] = lin(ks[4], Cw, C)
    p["b_cls_w"], p["b_cls_b"] = lin(ks[5], nc, Cw)
    return p


# ----------------------------- SLALoss forward -----------------------------

def sla_loss_forward(params, args, inputs, targets):
    # TODO(synk): the real `model` / `bifpn` are external modules passed to forward();
    # here both are deterministic 1x1-conv stubs, which lets them fuse into ONE backbone
    # pallas_call (chained convs, feat1 never re-read from HBM).
    bs = inputs.shape[0]
    nc = args.num_classes

    rot_inputs = rotation(inputs)                                    # (4*bs, Cin, H, W)
    # Batch normal + rotated passes: one (5*bs) backbone launch; cat([f, rot_f], 0) is free.
    full_inputs = jnp.concatenate([inputs, rot_inputs], axis=0)      # (5*bs, Cin, H, W)

    feat1, feat2, pooled1, pooled2 = pallas_fused_backbone(
        full_inputs, params["m_conv_w"], params["m_conv_b"],
        params["b_conv_w"], params["b_conv_b"])

    aux_targets = jnp.stack([targets * 4 + i for i in range(4)], axis=1).reshape(-1)

    # Classifiers, fc1/fc2, strided aux selection + mean and all six losses in one launch;
    # the (4*bs, 4*nc) aux/biaux logits never touch HBM.
    outputs, bi_outputs, aux_sel, biaux_sel, loss = pallas_sla_tail(
        pooled1, pooled2, params, targets, aux_targets,
        num_classes=nc, T=args.kd_T, aux_lamb=args.aux_lamb)

    outputs_cat = jnp.concatenate([outputs, aux_sel], axis=0)
    bi_outputs_cat = jnp.concatenate([bi_outputs, biaux_sel], axis=0)
    feats_cat = [feat1][-args.num_features:]      # already the (5*bs) concatenation
    bi_feats_cat = [feat2]
    return outputs_cat, bi_outputs_cat, feats_cat, bi_feats_cat, loss


# ----------------------------- main -----------------------------

if __name__ == "__main__":
    args = SimpleNamespace(
        num_classes=10,
        network_channels=[16, 32],   # last entry = feature channels C
        width=2,
        num_features=1,
        aux_lamb=1.0,
        distill="kd",
        kd_T=4.0,
    )

    key = jax.random.PRNGKey(0)
    k_params, k_x, k_t = jax.random.split(key, 3)

    batch, in_channels, spatial = 2, 4, 16
    inputs = jax.random.normal(k_x, (batch, in_channels, spatial, spatial), jnp.float32)
    targets = jax.random.randint(k_t, (batch,), 0, args.num_classes, jnp.int32)

    params = make_params(k_params, args, in_channels)

    fwd = jax.jit(lambda x, t: sla_loss_forward(params, args, x, t))
    outputs, bi_outputs, feats, bi_feats, loss = fwd(inputs, targets)

    jax.block_until_ready(loss)
    jax.block_until_ready(outputs)
    jax.block_until_ready(bi_outputs)
    for f in feats + bi_feats:
        jax.block_until_ready(f)

    C = args.network_channels[-1]
    assert outputs.shape == (2 * batch, args.num_classes)
    assert bi_outputs.shape == (2 * batch, args.num_classes)
    # Feature maps are returned NCHW (matching the PyTorch reference layout), in bf16.
    assert feats[0].shape == (5 * batch, C, spatial, spatial)
    assert bi_feats[0].shape == (5 * batch, C * args.width, spatial, spatial)
    assert bool(jnp.isfinite(loss))

    print("KERNEL_OK")
</pallas_src>

<mosaic_0001>
module attributes {stable_mosaic.version = 11 : i64} {
  func.func @_backbone_kernel(%arg0: i32, %arg1: i32, %arg2: memref<1x4x256xbf16, #tpu.memory_space<vmem>>, %arg3: memref<32x4xbf16, #tpu.memory_space<vmem>>, %arg4: memref<32x1xf32, #tpu.memory_space<vmem>>, %arg5: memref<64x32xbf16, #tpu.memory_space<vmem>>, %arg6: memref<64x1xf32, #tpu.memory_space<vmem>>, %arg7: memref<1x32x256xbf16, #tpu.memory_space<vmem>>, %arg8: memref<1x64x256xbf16, #tpu.memory_space<vmem>>, %arg9: memref<1x32x1xf32, #tpu.memory_space<vmem>>, %arg10: memref<1x64x1xf32, #tpu.memory_space<vmem>>, %arg11: memref<32x1xf32, #tpu.memory_space<vmem>>, %arg12: memref<64x1xf32, #tpu.memory_space<vmem>>) attributes {dimension_semantics = [#tpu.dimension_semantics<parallel>, #tpu.dimension_semantics<arbitrary>], iteration_bounds = array<i64: 10, 1>, scalar_prefetch = 0 : i64, scratch_operands = 2 : i64, tpu.core_type = #tpu.core_type<tc>, window_params = [{transform_indices = @transform_0, window_bounds = array<i64: 1, 4, 256>}, {pipeline_mode = #tpu.pipeline_mode<synchronous>, transform_indices = @transform_1, window_bounds = array<i64: 32, 4>}, {pipeline_mode = #tpu.pipeline_mode<synchronous>, transform_indices = @transform_2, window_bounds = array<i64: 32, 1>}, {pipeline_mode = #tpu.pipeline_mode<synchronous>, transform_indices = @transform_3, window_bounds = array<i64: 64, 32>}, {pipeline_mode = #tpu.pipeline_mode<synchronous>, transform_indices = @transform_4, window_bounds = array<i64: 64, 1>}, {transform_indices = @transform_5, window_bounds = array<i64: 1, 32, 256>}, {transform_indices = @transform_6, window_bounds = array<i64: 1, 64, 256>}, {transform_indices = @transform_7, window_bounds = array<i64: 1, 32, 1>}, {transform_indices = @transform_8, window_bounds = array<i64: 1, 64, 1>}]} {
    %c0_i32 = arith.constant 0 : i32
    %0 = arith.cmpi eq, %arg1, %c0_i32 : i32
    %1 = arith.extui %0 : i1 to i32
    %c0_i32_0 = arith.constant 0 : i32
    %2 = arith.cmpi ne, %1, %c0_i32_0 : i32
    scf.if %2 {
      %cst_32 = arith.constant 0.000000e+00 : f32
      %40 = vector.broadcast %cst_32 : f32 to vector<32x1xf32>
      %c0_33 = arith.constant 0 : index
      %c0_34 = arith.constant 0 : index
      %41 = vector.load %arg11[%c0_33, %c0_34] : memref<32x1xf32, #tpu.memory_space<vmem>>, vector<32x1xf32>
      tpu.vector_store %arg11[%c0_33, %c0_34], %40 {strides = array<i32>} : memref<32x1xf32, #tpu.memory_space<vmem>>, vector<32x1xf32>,
      %cst_35 = arith.constant 0.000000e+00 : f32
      %42 = vector.broadcast %cst_35 : f32 to vector<64x1xf32>
      %c0_36 = arith.constant 0 : index
      %c0_37 = arith.constant 0 : index
      %43 = vector.load %arg12[%c0_36, %c0_37] : memref<64x1xf32, #tpu.memory_space<vmem>>, vector<64x1xf32>
      tpu.vector_store %arg12[%c0_36, %c0_37], %42 {strides = array<i32>} : memref<64x1xf32, #tpu.memory_space<vmem>>, vector<64x1xf32>,
    } else {
    }
    %c0 = arith.constant 0 : index
    %c0_1 = arith.constant 0 : index
    %3 = vector.load %arg3[%c0, %c0_1] : memref<32x4xbf16, #tpu.memory_space<vmem>>, vector<32x4xbf16>
    %c0_2 = arith.constant 0 : index
    %c0_3 = arith.constant 0 : index
    %c0_4 = arith.constant 0 : index
    %4 = vector.load %arg2[%c0_2, %c0_3, %c0_4] : memref<1x4x256xbf16, #tpu.memory_space<vmem>>, vector<1x4x256xbf16>
    %5 = vector.shape_cast %4 : vector<1x4x256xbf16> to vector<4x256xbf16>
    %cst = arith.constant dense<0.000000e+00> : vector<32x256xf32>
    %6 = tpu.matmul %3, %5, %cst {dimension_numbers = #tpu.dot_dimension_numbers<[1], [0], [0], [1], [0, 0, 1, 1], [], []>} : vector<32x4xbf16>, vector<4x256xbf16>, vector<32x256xf32> -> vector<32x256xf32>
    %c0_5 = arith.constant 0 : index
    %c0_6 = arith.constant 0 : index
    %7 = vector.load %arg4[%c0_5, %c0_6] : memref<32x1xf32, #tpu.memory_space<vmem>>, vector<32x1xf32>
    %8 = vector.broadcast %7 : vector<32x1xf32> to vector<32x256xf32>
    %9 = arith.addf %6, %8 : vector<32x256xf32>
    %cst_7 = arith.constant 0.000000e+00 : f32
    %10 = vector.broadcast %cst_7 : f32 to vector<32x256xf32>
    %11 = arith.maximumf %9, %10 : vector<32x256xf32>
    %12 = arith.truncf %11 : vector<32x256xf32> to vector<32x256xbf16>
    %c0_8 = arith.constant 0 : index
    %c0_9 = arith.constant 0 : index
    %c0_10 = arith.constant 0 : index
    %13 = vector.load %arg7[%c0_8, %c0_9, %c0_10] : memref<1x32x256xbf16, #tpu.memory_space<vmem>>, vector<1x32x256xbf16>
    %14 = vector.shape_cast %13 : vector<1x32x256xbf16> to vector<32x256xbf16>
    %15 = vector.shape_cast %12 : vector<32x256xbf16> to vector<1x32x256xbf16>
    tpu.vector_store %arg7[%c0_8, %c0_9, %c0_10], %15 {strides = array<i32>} : memref<1x32x256xbf16, #tpu.memory_space<vmem>>, vector<1x32x256xbf16>,
    %c0_11 = arith.constant 0 : index
    %c0_12 = arith.constant 0 : index
    %16 = vector.load %arg5[%c0_11, %c0_12] : memref<64x32xbf16, #tpu.memory_space<vmem>>, vector<64x32xbf16>
    %cst_13 = arith.constant dense<0.000000e+00> : vector<64x256xf32>
    %17 = tpu.matmul %16, %12, %cst_13 {dimension_numbers = #tpu.dot_dimension_numbers<[1], [0], [0], [1], [0, 0, 1, 1], [], []>} : vector<64x32xbf16>, vector<32x256xbf16>, vector<64x256xf32> -> vector<64x256xf32>
    %c0_14 = arith.constant 0 : index
    %c0_15 = arith.constant 0 : index
    %18 = vector.load %arg6[%c0_14, %c0_15] : memref<64x1xf32, #tpu.memory_space<vmem>>, vector<64x1xf32>
    %19 = vector.broadcast %18 : vector<64x1xf32> to vector<64x256xf32>
    %20 = arith.addf %17, %19 : vector<64x256xf32>
    %cst_16 = arith.constant 0.000000e+00 : f32
    %21 = vector.broadcast %cst_16 : f32 to vector<64x256xf32>
    %22 = arith.maximumf %20, %21 : vector<64x256xf32>
    %23 = arith.truncf %22 : vector<64x256xf32> to vector<64x256xbf16>
    %c0_17 = arith.constant 0 : index
    %c0_18 = arith.constant 0 : index
    %c0_19 = arith.constant 0 : index
    %24 = vector.load %arg8[%c0_17, %c0_18, %c0_19] : memref<1x64x256xbf16, #tpu.memory_space<vmem>>, vector<1x64x256xbf16>
    %25 = vector.shape_cast %24 : vector<1x64x256xbf16> to vector<64x256xbf16>
    %26 = vector.shape_cast %23 : vector<64x256xbf16> to vector<1x64x256xbf16>
    tpu.vector_store %arg8[%c0_17, %c0_18, %c0_19], %26 {strides = array<i32>} : memref<1x64x256xbf16, #tpu.memory_space<vmem>>, vector<1x64x256xbf16>,
    %c0_20 = arith.constant 0 : index
    %c0_21 = arith.constant 0 : index
    %27 = vector.load %arg11[%c0_20, %c0_21] : memref<32x1xf32, #tpu.memory_space<vmem>>, vector<32x1xf32>
    %cst_22 = arith.constant dense<0.000000e+00> : vector<32xf32>
    %28 = vector.multi_reduction <add>, %11, %cst_22 [1] : vector<32x256xf32> to vector<32xf32>
    %29 = vector.shape_cast %28 : vector<32xf32> to vector<32x1xf32>
    %30 = arith.addf %27, %29 : vector<32x1xf32>
    %c0_23 = arith.constant 0 : index
    %c0_24 = arith.constant 0 : index
    %31 = vector.load %arg11[%c0_23, %c0_24] : memref<32x1xf32, #tpu.memory_space<vmem>>, vector<32x1xf32>
    tpu.vector_store %arg11[%c0_23, %c0_24], %30 {strides = array<i32>} : memref<32x1xf32, #tpu.memory_space<vmem>>, vector<32x1xf32>,
    %c0_25 = arith.constant 0 : index
    %c0_26 = arith.constant 0 : index
    %32 = vector.load %arg12[%c0_25, %c0_26] : memref<64x1xf32, #tpu.memory_space<vmem>>, vector<64x1xf32>
    %cst_27 = arith.constant dense<0.000000e+00> : vector<64xf32>
    %33 = vector.multi_reduction <add>, %22, %cst_27 [1] : vector<64x256xf32> to vector<64xf32>
    %34 = vector.shape_cast %33 : vector<64xf32> to vector<64x1xf32>
    %35 = arith.addf %32, %34 : vector<64x1xf32>
    %c0_28 = arith.constant 0 : index
    %c0_29 = arith.constant 0 : index
    %36 = vector.load %arg12[%c0_28, %c0_29] : memref<64x1xf32, #tpu.memory_space<vmem>>, vector<64x1xf32>
    tpu.vector_store %arg12[%c0_28, %c0_29], %35 {strides = array<i32>} : memref<64x1xf32, #tpu.memory_space<vmem>>, vector<64x1xf32>,
    %c0_i32_30 = arith.constant 0 : i32
    %37 = arith.cmpi eq, %arg1, %c0_i32_30 : i32
    %38 = arith.extui %37 : i1 to i32
    %c0_i32_31 = arith.constant 0 : i32
    %39 = arith.cmpi ne, %38, %c0_i32_31 : i32
    scf.if %39 {
      %c0_32 = arith.constant 0 : index
      %c0_33 = arith.constant 0 : index
      %40 = vector.load %arg11[%c0_32, %c0_33] : memref<32x1xf32, #tpu.memory_space<vmem>>, vector<32x1xf32>
      %cst_34 = arith.constant 3.906250e-03 : f32
      %41 = vector.broadcast %cst_34 : f32 to vector<32x1xf32>
      %42 = arith.mulf %40, %41 : vector<32x1xf32>
      %c0_35 = arith.constant 0 : index
      %c0_36 = arith.constant 0 : index
      %c0_37 = arith.constant 0 : index
      %43 = vector.load %arg9[%c0_35, %c0_36, %c0_37] : memref<1x32x1xf32, #tpu.memory_space<vmem>>, vector<1x32x1xf32>
      %44 = vector.shape_cast %43 : vector<1x32x1xf32> to vector<32x1xf32>
      %45 = vector.shape_cast %42 : vector<32x1xf32> to vector<1x32x1xf32>
      tpu.vector_store %arg9[%c0_35, %c0_36, %c0_37], %45 {strides = array<i32>} : memref<1x32x1xf32, #tpu.memory_space<vmem>>, vector<1x32x1xf32>,
      %c0_38 = arith.constant 0 : index
      %c0_39 = arith.constant 0 : index
      %46 = vector.load %arg12[%c0_38, %c0_39] : memref<64x1xf32, #tpu.memory_space<vmem>>, vector<64x1xf32>
      %cst_40 = arith.constant 3.906250e-03 : f32
      %47 = vector.broadcast %cst_40 : f32 to vector<64x1xf32>
      %48 = arith.mulf %46, %47 : vector<64x1xf32>
      %c0_41 = arith.constant 0 : index
      %c0_42 = arith.constant 0 : index
      %c0_43 = arith.constant 0 : index
      %49 = vector.load %arg10[%c0_41, %c0_42, %c0_43] : memref<1x64x1xf32, #tpu.memory_space<vmem>>, vector<1x64x1xf32>
      %50 = vector.shape_cast %49 : vector<1x64x1xf32> to vector<64x1xf32>
      %51 = vector.shape_cast %48 : vector<64x1xf32> to vector<1x64x1xf32>
      tpu.vector_store %arg10[%c0_41, %c0_42, %c0_43], %51 {strides = array<i32>} : memref<1x64x1xf32, #tpu.memory_space<vmem>>, vector<1x64x1xf32>,
    } else {
    }
    return
  }
  func.func @transform_0(%arg0: i32, %arg1: i32) -> (i32, i32, i32) {
    %c0_i32 = arith.constant 0 : i32
    %c0_i32_0 = arith.constant 0 : i32
    return %arg0, %c0_i32, %arg1 : i32, i32, i32
  }
  func.func @transform_1(%arg0: i32, %arg1: i32) -> (i32, i32) {
    %c0_i32 = arith.constant 0 : i32
    %c0_i32_0 = arith.constant 0 : i32
    %c0_i32_1 = arith.constant 0 : i32
    return %c0_i32, %c0_i32_0 : i32, i32
  }
  func.func @transform_2(%arg0: i32, %arg1: i32) -> (i32, i32) {
    %c0_i32 = arith.constant 0 : i32
    %c0_i32_0 = arith.constant 0 : i32
    %c0_i32_1 = arith.constant 0 : i32
    return %c0_i32, %c0_i32_0 : i32, i32
  }
  func.func @transform_3(%arg0: i32, %arg1: i32) -> (i32, i32) {
    %c0_i32 = arith.constant 0 : i32
    %c0_i32_0 = arith.constant 0 : i32
    %c0_i32_1 = arith.constant 0 : i32
    return %c0_i32, %c0_i32_0 : i32, i32
  }
  func.func @transform_4(%arg0: i32, %arg1: i32) -> (i32, i32) {
    %c0_i32 = arith.constant 0 : i32
    %c0_i32_0 = arith.constant 0 : i32
    %c0_i32_1 = arith.constant 0 : i32
    return %c0_i32, %c0_i32_0 : i32, i32
  }
  func.func @transform_5(%arg0: i32, %arg1: i32) -> (i32, i32, i32) {
    %c0_i32 = arith.constant 0 : i32
    %c0_i32_0 = arith.constant 0 : i32
    return %arg0, %c0_i32, %arg1 : i32, i32, i32
  }
  func.func @transform_6(%arg0: i32, %arg1: i32) -> (i32, i32, i32) {
    %c0_i32 = arith.constant 0 : i32
    %c0_i32_0 = arith.constant 0 : i32
    return %arg0, %c0_i32, %arg1 : i32, i32, i32
  }
  func.func @transform_7(%arg0: i32, %arg1: i32) -> (i32, i32, i32) {
    %c0_i32 = arith.constant 0 : i32
    %c0_i32_0 = arith.constant 0 : i32
    %c0_i32_1 = arith.constant 0 : i32
    return %arg0, %c0_i32, %c0_i32_0 : i32, i32, i32
  }
  func.func @transform_8(%arg0: i32, %arg1: i32) -> (i32, i32, i32) {
    %c0_i32 = arith.constant 0 : i32
    %c0_i32_0 = arith.constant 0 : i32
    %c0_i32_1 = arith.constant 0 : i32
    return %arg0, %c0_i32, %c0_i32_0 : i32, i32, i32
  }
}

module attributes {stable_mosaic.version = 11 : i64} {
  func.func @_tail_kernel(%arg0: i32, %arg1: memref<2x32xf32, #tpu.memory_space<vmem>>, %arg2: memref<8x32xf32, #tpu.memory_space<vmem>>, %arg3: memref<2x64xf32, #tpu.memory_space<vmem>>, %arg4: memref<8x64xf32, #tpu.memory_space<vmem>>, %arg5: memref<32x10xf32, #tpu.memory_space<vmem>>, %arg6: memref<1x10xf32, #tpu.memory_space<vmem>>, %arg7: memref<64x10xf32, #tpu.memory_space<vmem>>, %arg8: memref<1x10xf32, #tpu.memory_space<vmem>>, %arg9: memref<32x40xf32, #tpu.memory_space<vmem>>, %arg10: memref<1x40xf32, #tpu.memory_space<vmem>>, %arg11: memref<64x40xf32, #tpu.memory_space<vmem>>, %arg12: memref<1x40xf32, #tpu.memory_space<vmem>>, %arg13: memref<2x1xi32, #tpu.memory_space<vmem>>, %arg14: memref<8x1xi32, #tpu.memory_space<vmem>>, %arg15: memref<2x10xf32, #tpu.memory_space<vmem>>, %arg16: memref<2x10xf32, #tpu.memory_space<vmem>>, %arg17: memref<2x10xf32, #tpu.memory_space<vmem>>, %arg18: memref<2x10xf32, #tpu.memory_space<vmem>>, %arg19: memref<1x1xf32, #tpu.memory_space<vmem>>) attributes {dimension_semantics = [#tpu.dimension_semantics<arbitrary>], iteration_bounds = array<i64: 1>, scalar_prefetch = 0 : i64, scratch_operands = 0 : i64, tpu.core_type = #tpu.core_type<tc>, window_params = [{pipeline_mode = #tpu.pipeline_mode<synchronous>, transform_indices = @transform_0, window_bounds = array<i64: 2, 32>}, {pipeline_mode = #tpu.pipeline_mode<synchronous>, transform_indices = @transform_1, window_bounds = array<i64: 8, 32>}, {pipeline_mode = #tpu.pipeline_mode<synchronous>, transform_indices = @transform_2, window_bounds = array<i64: 2, 64>}, {pipeline_mode = #tpu.pipeline_mode<synchronous>, transform_indices = @transform_3, window_bounds = array<i64: 8, 64>}, {pipeline_mode = #tpu.pipeline_mode<synchronous>, transform_indices = @transform_4, window_bounds = array<i64: 32, 10>}, {pipeline_mode = #tpu.pipeline_mode<synchronous>, transform_indices = @transform_5, window_bounds = array<i64: 1, 10>}, {pipeline_mode = #tpu.pipeline_mode<synchronous>, transform_indices = @transform_6, window_bounds = array<i64: 64, 10>}, {pipeline_mode = #tpu.pipeline_mode<synchronous>, transform_indices = @transform_7, window_bounds = array<i64: 1, 10>}, {pipeline_mode = #tpu.pipeline_mode<synchronous>, transform_indices = @transform_8, window_bounds = array<i64: 32, 40>}, {pipeline_mode = #tpu.pipeline_mode<synchronous>, transform_indices = @transform_9, window_bounds = array<i64: 1, 40>}, {pipeline_mode = #tpu.pipeline_mode<synchronous>, transform_indices = @transform_10, window_bounds = array<i64: 64, 40>}, {pipeline_mode = #tpu.pipeline_mode<synchronous>, transform_indices = @transform_11, window_bounds = array<i64: 1, 40>}, {pipeline_mode = #tpu.pipeline_mode<synchronous>, transform_indices = @transform_12, window_bounds = array<i64: 2, 1>}, {pipeline_mode = #tpu.pipeline_mode<synchronous>, transform_indices = @transform_13, window_bounds = array<i64: 8, 1>}, {pipeline_mode = #tpu.pipeline_mode<synchronous>, transform_indices = @transform_14, window_bounds = array<i64: 2, 10>}, {pipeline_mode = #tpu.pipeline_mode<synchronous>, transform_indices = @transform_15, window_bounds = array<i64: 2, 10>}, {pipeline_mode = #tpu.pipeline_mode<synchronous>, transform_indices = @transform_16, window_bounds = array<i64: 2, 10>}, {pipeline_mode = #tpu.pipeline_mode<synchronous>, transform_indices = @transform_17, window_bounds = array<i64: 2, 10>}, {pipeline_mode = #tpu.pipeline_mode<synchronous>, transform_indices = @transform_18, window_bounds = array<i64: 1, 1>}]} {
    %c0 = arith.constant 0 : index
    %c0_0 = arith.constant 0 : index
    %0 = vector.load %arg1[%c0, %c0_0] : memref<2x32xf32, #tpu.memory_space<vmem>>, vector<2x32xf32>
    %c0_1 = arith.constant 0 : index
    %c0_2 = arith.constant 0 : index
    %1 = vector.load %arg5[%c0_1, %c0_2] : memref<32x10xf32, #tpu.memory_space<vmem>>, vector<32x10xf32>
    %cst = arith.constant dense<0.000000e+00> : vector<2x10xf32>
    %2 = tpu.matmul %0, %1, %cst {dimension_numbers = #tpu.dot_dimension_numbers<[1], [0], [0], [1], [0, 0, 1, 1], [], []>} : vector<2x32xf32>, vector<32x10xf32>, vector<2x10xf32> -> vector<2x10xf32>
    %c0_3 = arith.constant 0 : index
    %c0_4 = arith.constant 0 : index
    %3 = vector.load %arg6[%c0_3, %c0_4] : memref<1x10xf32, #tpu.memory_space<vmem>>, vector<1x10xf32>
    %4 = vector.broadcast %3 : vector<1x10xf32> to vector<2x10xf32>
    %5 = arith.addf %2, %4 : vector<2x10xf32>
    %c0_5 = arith.constant 0 : index
    %c0_6 = arith.constant 0 : index
    %6 = vector.load %arg3[%c0_5, %c0_6] : memref<2x64xf32, #tpu.memory_space<vmem>>, vector<2x64xf32>
    %c0_7 = arith.constant 0 : index
    %c0_8 = arith.constant 0 : index
    %7 = vector.load %arg7[%c0_7, %c0_8] : memref<64x10xf32, #tpu.memory_space<vmem>>, vector<64x10xf32>
    %cst_9 = arith.constant dense<0.000000e+00> : vector<2x10xf32>
    %8 = tpu.matmul %6, %7, %cst_9 {dimension_numbers = #tpu.dot_dimension_numbers<[1], [0], [0], [1], [0, 0, 1, 1], [], []>} : vector<2x64xf32>, vector<64x10xf32>, vector<2x10xf32> -> vector<2x10xf32>
    %c0_10 = arith.constant 0 : index
    %c0_11 = arith.constant 0 : index
    %9 = vector.load %arg8[%c0_10, %c0_11] : memref<1x10xf32, #tpu.memory_space<vmem>>, vector<1x10xf32>
    %10 = vector.broadcast %9 : vector<1x10xf32> to vector<2x10xf32>
    %11 = arith.addf %8, %10 : vector<2x10xf32>
    %c0_12 = arith.constant 0 : index
    %c0_13 = arith.constant 0 : index
    %12 = vector.load %arg2[%c0_12, %c0_13] : memref<8x32xf32, #tpu.memory_space<vmem>>, vector<8x32xf32>
    %c0_14 = arith.constant 0 : index
    %c0_15 = arith.constant 0 : index
    %13 = vector.load %arg9[%c0_14, %c0_15] : memref<32x40xf32, #tpu.memory_space<vmem>>, vector<32x40xf32>
    %cst_16 = arith.constant dense<0.000000e+00> : vector<8x40xf32>
    %14 = tpu.matmul %12, %13, %cst_16 {dimension_numbers = #tpu.dot_dimension_numbers<[1], [0], [0], [1], [0, 0, 1, 1], [], []>} : vector<8x32xf32>, vector<32x40xf32>, vector<8x40xf32> -> vector<8x40xf32>
    %c0_17 = arith.constant 0 : index
    %c0_18 = arith.constant 0 : index
    %15 = vector.load %arg10[%c0_17, %c0_18] : memref<1x40xf32, #tpu.memory_space<vmem>>, vector<1x40xf32>
    %16 = vector.broadcast %15 : vector<1x40xf32> to vector<8x40xf32>
    %17 = arith.addf %14, %16 : vector<8x40xf32>
    %c0_19 = arith.constant 0 : index
    %c0_20 = arith.constant 0 : index
    %18 = vector.load %arg4[%c0_19, %c0_20] : memref<8x64xf32, #tpu.memory_space<vmem>>, vector<8x64xf32>
    %c0_21 = arith.constant 0 : index
    %c0_22 = arith.constant 0 : index
    %19 = vector.load %arg11[%c0_21, %c0_22] : memref<64x40xf32, #tpu.memory_space<vmem>>, vector<64x40xf32>
    %cst_23 = arith.constant dense<0.000000e+00> : vector<8x40xf32>
    %20 = tpu.matmul %18, %19, %cst_23 {dimension_numbers = #tpu.dot_dimension_numbers<[1], [0], [0], [1], [0, 0, 1, 1], [], []>} : vector<8x64xf32>, vector<64x40xf32>, vector<8x40xf32> -> vector<8x40xf32>
    %c0_24 = arith.constant 0 : index
    %c0_25 = arith.constant 0 : index
    %21 = vector.load %arg12[%c0_24, %c0_25] : memref<1x40xf32, #tpu.memory_space<vmem>>, vector<1x40xf32>
    %22 = vector.broadcast %21 : vector<1x40xf32> to vector<8x40xf32>
    %23 = arith.addf %20, %22 : vector<8x40xf32>
    %24 = tpu.iota {dimensions = array<i32: 0>} : vector<8x40xi32>
    %25 = tpu.iota {dimensions = array<i32: 1>} : vector<8x40xi32>
    %c3_i32 = arith.constant 3 : i32
    %26 = vector.broadcast %c3_i32 : i32 to vector<8x40xi32>
    %27 = arith.andi %24, %26 : vector<8x40xi32>
    %c3_i32_26 = arith.constant 3 : i32
    %28 = vector.broadcast %c3_i32_26 : i32 to vector<8x40xi32>
    %29 = arith.andi %25, %28 : vector<8x40xi32>
    %30 = arith.cmpi eq, %27, %29 : vector<8x40xi32>
    %cst_27 = arith.constant 0.000000e+00 : f32
    %31 = vector.broadcast %cst_27 : f32 to vector<8x40xf32>
    %32 = arith.select %30, %17, %31 : vector<8x40xi1>, vector<8x40xf32>
    %33 = tpu.iota {dimensions = array<i32: 0>} : vector<2x8xi32>
    %34 = tpu.iota {dimensions = array<i32: 1>} : vector<2x8xi32>
    %c2_i32 = arith.constant 2 : i32
    %35 = vector.broadcast %c2_i32 : i32 to vector<2x8xi32>
    %36 = arith.shrsi %34, %35 : vector<2x8xi32>
    %37 = arith.cmpi eq, %36, %33 : vector<2x8xi32>
    %38 = arith.extui %37 : vector<2x8xi1> to vector<2x8xi32>
    %39 = arith.sitofp %38 : vector<2x8xi32> to vector<2x8xf32>
    %40 = tpu.iota {dimensions = array<i32: 0>} : vector<40x10xi32>
    %41 = tpu.iota {dimensions = array<i32: 1>} : vector<40x10xi32>
    %c2_i32_28 = arith.constant 2 : i32
    %42 = vector.broadcast %c2_i32_28 : i32 to vector<40x10xi32>
    %43 = arith.shrsi %40, %42 : vector<40x10xi32>
    %44 = arith.cmpi eq, %43, %41 : vector<40x10xi32>
    %45 = arith.extui %44 : vector<40x10xi1> to vector<40x10xi32>
    %46 = arith.sitofp %45 : vector<40x10xi32> to vector<40x10xf32>
    %cst_29 = arith.constant dense<0.000000e+00> : vector<2x40xf32>
    %47 = tpu.matmul %39, %32, %cst_29 {dimension_numbers = #tpu.dot_dimension_numbers<[1], [0], [0], [1], [0, 0, 1, 1], [], []>} : vector<2x8xf32>, vector<8x40xf32>, vector<2x40xf32> -> vector<2x40xf32>
    %cst_30 = arith.constant dense<0.000000e+00> : vector<2x10xf32>
    %48 = tpu.matmul %47, %46, %cst_30 {dimension_numbers = #tpu.dot_dimension_numbers<[1], [0], [0], [1], [0, 0, 1, 1], [], []>} : vector<2x40xf32>, vector<40x10xf32>, vector<2x10xf32> -> vector<2x10xf32>
    %cst_31 = arith.constant 2.500000e-01 : f32
    %49 = vector.broadcast %cst_31 : f32 to vector<2x10xf32>
    %50 = arith.mulf %48, %49 : vector<2x10xf32>
    %51 = tpu.iota {dimensions = array<i32: 0>} : vector<8x40xi32>
    %52 = tpu.iota {dimensions = array<i32: 1>} : vector<8x40xi32>
    %c3_i32_32 = arith.constant 3 : i32
    %53 = vector.broadcast %c3_i32_32 : i32 to vector<8x40xi32>
    %54 = arith.andi %51, %53 : vector<8x40xi32>
    %c3_i32_33 = arith.constant 3 : i32
    %55 = vector.broadcast %c3_i32_33 : i32 to vector<8x40xi32>
    %56 = arith.andi %52, %55 : vector<8x40xi32>
    %57 = arith.cmpi eq, %54, %56 : vector<8x40xi32>
    %cst_34 = arith.constant 0.000000e+00 : f32
    %58 = vector.broadcast %cst_34 : f32 to vector<8x40xf32>
    %59 = arith.select %57, %23, %58 : vector<8x40xi1>, vector<8x40xf32>
    %60 = tpu.iota {dimensions = array<i32: 0>} : vector<2x8xi32>
    %61 = tpu.iota {dimensions = array<i32: 1>} : vector<2x8xi32>
    %c2_i32_35 = arith.constant 2 : i32
    %62 = vector.broadcast %c2_i32_35 : i32 to vector<2x8xi32>
    %63 = arith.shrsi %61, %62 : vector<2x8xi32>
    %64 = arith.cmpi eq, %63, %60 : vector<2x8xi32>
    %65 = arith.extui %64 : vector<2x8xi1> to vector<2x8xi32>
    %66 = arith.sitofp %65 : vector<2x8xi32> to vector<2x8xf32>
    %67 = tpu.iota {dimensions = array<i32: 0>} : vector<40x10xi32>
    %68 = tpu.iota {dimensions = array<i32: 1>} : vector<40x10xi32>
    %c2_i32_36 = arith.constant 2 : i32
    %69 = vector.broadcast %c2_i32_36 : i32 to vector<40x10xi32>
    %70 = arith.shrsi %67, %69 : vector<40x10xi32>
    %71 = arith.cmpi eq, %70, %68 : vector<40x10xi32>
    %72 = arith.extui %71 : vector<40x10xi1> to vector<40x10xi32>
    %73 = arith.sitofp %72 : vector<40x10xi32> to vector<40x10xf32>
    %cst_37 = arith.constant dense<0.000000e+00> : vector<2x40xf32>
    %74 = tpu.matmul %66, %59, %cst_37 {dimension_numbers = #tpu.dot_dimension_numbers<[1], [0], [0], [1], [0, 0, 1, 1], [], []>} : vector<2x8xf32>, vector<8x40xf32>, vector<2x40xf32> -> vector<2x40xf32>
    %cst_38 = arith.constant dense<0.000000e+00> : vector<2x10xf32>
    %75 = tpu.matmul %74, %73, %cst_38 {dimension_numbers = #tpu.dot_dimension_numbers<[1], [0], [0], [1], [0, 0, 1, 1], [], []>} : vector<2x40xf32>, vector<40x10xf32>, vector<2x10xf32> -> vector<2x10xf32>
    %cst_39 = arith.constant 2.500000e-01 : f32
    %76 = vector.broadcast %cst_39 : f32 to vector<2x10xf32>
    %77 = arith.mulf %75, %76 : vector<2x10xf32>
    %c0_40 = arith.constant 0 : index
    %c0_41 = arith.constant 0 : index
    %78 = vector.load %arg13[%c0_40, %c0_41] : memref<2x1xi32, #tpu.memory_space<vmem>>, vector<2x1xi32>
    %c0_42 = arith.constant 0 : index
    %c0_43 = arith.constant 0 : index
    %79 = vector.load %arg14[%c0_42, %c0_43] : memref<8x1xi32, #tpu.memory_space<vmem>>, vector<8x1xi32>
    %cst_44 = arith.constant dense<0xFF800000> : vector<2xf32>
    %80 = vector.multi_reduction <maximumf>, %5, %cst_44 [1] : vector<2x10xf32> to vector<2xf32>
    %81 = vector.shape_cast %80 : vector<2xf32> to vector<2x1xf32>
    %82 = vector.broadcast %81 : vector<2x1xf32> to vector<2x10xf32>
    %83 = arith.subf %5, %82 : vector<2x10xf32>
    %84 = math.exp %83 : vector<2x10xf32>
    %cst_45 = arith.constant dense<0.000000e+00> : vector<2xf32>
    %85 = vector.multi_reduction <add>, %84, %cst_45 [1] : vector<2x10xf32> to vector<2xf32>
    %86 = vector.shape_cast %85 : vector<2xf32> to vector<2x1xf32>
    %87 = math.log %86 : vector<2x1xf32>
    %88 = arith.addf %81, %87 : vector<2x1xf32>
    %89 = tpu.iota {dimensions = array<i32: 1>} : vector<2x10xi32>
    %90 = vector.broadcast %78 : vector<2x1xi32> to vector<2x10xi32>
    %91 = arith.cmpi eq, %89, %90 : vector<2x10xi32>
    %cst_46 = arith.constant 0.000000e+00 : f32
    %92 = vector.broadcast %cst_46 : f32 to vector<2x10xf32>
    %93 = arith.select %91, %5, %92 : vector<2x10xi1>, vector<2x10xf32>
    %cst_47 = arith.constant dense<0.000000e+00> : vector<2xf32>
    %94 = vector.multi_reduction <add>, %93, %cst_47 [1] : vector<2x10xf32> to vector<2xf32>
    %95 = vector.shape_cast %94 : vector<2xf32> to vector<2x1xf32>
    %96 = arith.subf %88, %95 : vector<2x1xf32>
    %cst_48 = arith.constant dense<0.000000e+00> : vector<1xf32>
    %97 = vector.multi_reduction <add>, %96, %cst_48 [0] : vector<2x1xf32> to vector<1xf32>
    %98 = vector.shape_cast %97 : vector<1xf32> to vector<1x1xf32>
    %cst_49 = arith.constant 5.000000e-01 : f32
    %99 = vector.broadcast %cst_49 : f32 to vector<1x1xf32>
    %100 = arith.mulf %98, %99 : vector<1x1xf32>
    %cst_50 = arith.constant dense<0xFF800000> : vector<2xf32>
    %101 = vector.multi_reduction <maximumf>, %11, %cst_50 [1] : vector<2x10xf32> to vector<2xf32>
    %102 = vector.shape_cast %101 : vector<2xf32> to vector<2x1xf32>
    %103 = vector.broadcast %102 : vector<2x1xf32> to vector<2x10xf32>
    %104 = arith.subf %11, %103 : vector<2x10xf32>
    %105 = math.exp %104 : vector<2x10xf32>
    %cst_51 = arith.constant dense<0.000000e+00> : vector<2xf32>
    %106 = vector.multi_reduction <add>, %105, %cst_51 [1] : vector<2x10xf32> to vector<2xf32>
    %107 = vector.shape_cast %106 : vector<2xf32> to vector<2x1xf32>
    %108 = math.log %107 : vector<2x1xf32>
    %109 = arith.addf %102, %108 : vector<2x1xf32>
    %110 = tpu.iota {dimensions = array<i32: 1>} : vector<2x10xi32>
    %111 = vector.broadcast %78 : vector<2x1xi32> to vector<2x10xi32>
    %112 = arith.cmpi eq, %110, %111 : vector<2x10xi32>
    %cst_52 = arith.constant 0.000000e+00 : f32
    %113 = vector.broadcast %cst_52 : f32 to vector<2x10xf32>
    %114 = arith.select %112, %11, %113 : vector<2x10xi1>, vector<2x10xf32>
    %cst_53 = arith.constant dense<0.000000e+00> : vector<2xf32>
    %115 = vector.multi_reduction <add>, %114, %cst_53 [1] : vector<2x10xf32> to vector<2xf32>
    %116 = vector.shape_cast %115 : vector<2xf32> to vector<2x1xf32>
    %117 = arith.subf %109, %116 : vector<2x1xf32>
    %cst_54 = arith.constant dense<0.000000e+00> : vector<1xf32>
    %118 = vector.multi_reduction <add>, %117, %cst_54 [0] : vector<2x1xf32> to vector<1xf32>
    %119 = vector.shape_cast %118 : vector<1xf32> to vector<1x1xf32>
    %cst_55 = arith.constant 5.000000e-01 : f32
    %120 = vector.broadcast %cst_55 : f32 to vector<1x1xf32>
    %121 = arith.mulf %119, %120 : vector<1x1xf32>
    %122 = arith.addf %100, %121 : vector<1x1xf32>
    %cst_56 = arith.constant dense<0xFF800000> : vector<8xf32>
    %123 = vector.multi_reduction <maximumf>, %17, %cst_56 [1] : vector<8x40xf32> to vector<8xf32>
    %124 = vector.shape_cast %123 : vector<8xf32> to vector<8x1xf32>
    %125 = vector.broadcast %124 : vector<8x1xf32> to vector<8x40xf32>
    %126 = arith.subf %17, %125 : vector<8x40xf32>
    %127 = math.exp %126 : vector<8x40xf32>
    %cst_57 = arith.constant dense<0.000000e+00> : vector<8xf32>
    %128 = vector.multi_reduction <add>, %127, %cst_57 [1] : vector<8x40xf32> to vector<8xf32>
    %129 = vector.shape_cast %128 : vector<8xf32> to vector<8x1xf32>
    %130 = math.log %129 : vector<8x1xf32>
    %131 = arith.addf %124, %130 : vector<8x1xf32>
    %132 = tpu.iota {dimensions = array<i32: 1>} : vector<8x40xi32>
    %133 = vector.broadcast %79 : vector<8x1xi32> to vector<8x40xi32>
    %134 = arith.cmpi eq, %132, %133 : vector<8x40xi32>
    %cst_58 = arith.constant 0.000000e+00 : f32
    %135 = vector.broadcast %cst_58 : f32 to vector<8x40xf32>
    %136 = arith.select %134, %17, %135 : vector<8x40xi1>, vector<8x40xf32>
    %cst_59 = arith.constant dense<0.000000e+00> : vector<8xf32>
    %137 = vector.multi_reduction <add>, %136, %cst_59 [1] : vector<8x40xf32> to vector<8xf32>
    %138 = vector.shape_cast %137 : vector<8xf32> to vector<8x1xf32>
    %139 = arith.subf %131, %138 : vector<8x1xf32>
    %cst_60 = arith.constant dense<0.000000e+00> : vector<1xf32>
    %140 = vector.multi_reduction <add>, %139, %cst_60 [0] : vector<8x1xf32> to vector<1xf32>
    %141 = vector.shape_cast %140 : vector<1xf32> to vector<1x1xf32>
    %cst_61 = arith.constant 1.250000e-01 : f32
    %142 = vector.broadcast %cst_61 : f32 to vector<1x1xf32>
    %143 = arith.mulf %141, %142 : vector<1x1xf32>
    %cst_62 = arith.constant dense<0xFF800000> : vector<8xf32>
    %144 = vector.multi_reduction <maximumf>, %23, %cst_62 [1] : vector<8x40xf32> to vector<8xf32>
    %145 = vector.shape_cast %144 : vector<8xf32> to vector<8x1xf32>
    %146 = vector.broadcast %145 : vector<8x1xf32> to vector<8x40xf32>
    %147 = arith.subf %23, %146 : vector<8x40xf32>
    %148 = math.exp %147 : vector<8x40xf32>
    %cst_63 = arith.constant dense<0.000000e+00> : vector<8xf32>
    %149 = vector.multi_reduction <add>, %148, %cst_63 [1] : vector<8x40xf32> to vector<8xf32>
    %150 = vector.shape_cast %149 : vector<8xf32> to vector<8x1xf32>
    %151 = math.log %150 : vector<8x1xf32>
    %152 = arith.addf %145, %151 : vector<8x1xf32>
    %153 = tpu.iota {dimensions = array<i32: 1>} : vector<8x40xi32>
    %154 = vector.broadcast %79 : vector<8x1xi32> to vector<8x40xi32>
    %155 = arith.cmpi eq, %153, %154 : vector<8x40xi32>
    %cst_64 = arith.constant 0.000000e+00 : f32
    %156 = vector.broadcast %cst_64 : f32 to vector<8x40xf32>
    %157 = arith.select %155, %23, %156 : vector<8x40xi1>, vector<8x40xf32>
    %cst_65 = arith.constant dense<0.000000e+00> : vector<8xf32>
    %158 = vector.multi_reduction <add>, %157, %cst_65 [1] : vector<8x40xf32> to vector<8xf32>
    %159 = vector.shape_cast %158 : vector<8xf32> to vector<8x1xf32>
    %160 = arith.subf %152, %159 : vector<8x1xf32>
    %cst_66 = arith.constant dense<0.000000e+00> : vector<1xf32>
    %161 = vector.multi_reduction <add>, %160, %cst_66 [0] : vector<8x1xf32> to vector<1xf32>
    %162 = vector.shape_cast %161 : vector<1xf32> to vector<1x1xf32>
    %cst_67 = arith.constant 1.250000e-01 : f32
    %163 = vector.broadcast %cst_67 : f32 to vector<1x1xf32>
    %164 = arith.mulf %162, %163 : vector<1x1xf32>
    %165 = arith.addf %143, %164 : vector<1x1xf32>
    %cst_68 = arith.constant 2.500000e-01 : f32
    %166 = vector.broadcast %cst_68 : f32 to vector<2x10xf32>
    %167 = arith.mulf %5, %166 : vector<2x10xf32>
    %cst_69 = arith.constant dense<0xFF800000> : vector<2xf32>
    %168 = vector.multi_reduction <maximumf>, %167, %cst_69 [1] : vector<2x10xf32> to vector<2xf32>
    %169 = vector.shape_cast %168 : vector<2xf32> to vector<2x1xf32>
    %170 = vector.broadcast %169 : vector<2x1xf32> to vector<2x10xf32>
    %171 = arith.subf %167, %170 : vector<2x10xf32>
    %172 = vector.broadcast %169 : vector<2x1xf32> to vector<2x10xf32>
    %173 = arith.subf %167, %172 : vector<2x10xf32>
    %174 = math.exp %173 : vector<2x10xf32>
    %cst_70 = arith.constant dense<0.000000e+00> : vector<2xf32>
    %175 = vector.multi_reduction <add>, %174, %cst_70 [1] : vector<2x10xf32> to vector<2xf32>
    %176 = vector.shape_cast %175 : vector<2xf32> to vector<2x1xf32>
    %177 = math.log %176 : vector<2x1xf32>
    %178 = vector.broadcast %177 : vector<2x1xf32> to vector<2x10xf32>
    %179 = arith.subf %171, %178 : vector<2x10xf32>
    %cst_71 = arith.constant 2.500000e-01 : f32
    %180 = vector.broadcast %cst_71 : f32 to vector<2x10xf32>
    %181 = arith.mulf %50, %180 : vector<2x10xf32>
    %cst_72 = arith.constant dense<0xFF800000> : vector<2xf32>
    %182 = vector.multi_reduction <maximumf>, %181, %cst_72 [1] : vector<2x10xf32> to vector<2xf32>
    %183 = vector.shape_cast %182 : vector<2xf32> to vector<2x1xf32>
    %184 = vector.broadcast %183 : vector<2x1xf32> to vector<2x10xf32>
    %185 = arith.subf %181, %184 : vector<2x10xf32>
    %186 = vector.broadcast %183 : vector<2x1xf32> to vector<2x10xf32>
    %187 = arith.subf %181, %186 : vector<2x10xf32>
    %188 = math.exp %187 : vector<2x10xf32>
    %cst_73 = arith.constant dense<0.000000e+00> : vector<2xf32>
    %189 = vector.multi_reduction <add>, %188, %cst_73 [1] : vector<2x10xf32> to vector<2xf32>
    %190 = vector.shape_cast %189 : vector<2xf32> to vector<2x1xf32>
    %191 = math.log %190 : vector<2x1xf32>
    %192 = vector.broadcast %191 : vector<2x1xf32> to vector<2x10xf32>
    %193 = arith.subf %185, %192 : vector<2x10xf32>
    %194 = math.exp %193 : vector<2x10xf32>
    %195 = arith.subf %193, %179 : vector<2x10xf32>
    %196 = arith.mulf %194, %195 : vector<2x10xf32>
    %cst_74 = arith.constant dense<0.000000e+00> : vector<2xf32>
    %197 = vector.multi_reduction <add>, %196, %cst_74 [1] : vector<2x10xf32> to vector<2xf32>
    %198 = vector.shape_cast %197 : vector<2xf32> to vector<2x1xf32>
    %cst_75 = arith.constant dense<0.000000e+00> : vector<1xf32>
    %199 = vector.multi_reduction <add>, %198, %cst_75 [0] : vector<2x1xf32> to vector<1xf32>
    %200 = vector.shape_cast %199 : vector<1xf32> to vector<1x1xf32>
    %cst_76 = arith.constant 8.000000e+00 : f32
    %201 = vector.broadcast %cst_76 : f32 to vector<1x1xf32>
    %202 = arith.mulf %200, %201 : vector<1x1xf32>
    %cst_77 = arith.constant 2.500000e-01 : f32
    %203 = vector.broadcast %cst_77 : f32 to vector<2x10xf32>
    %204 = arith.mulf %11, %203 : vector<2x10xf32>
    %cst_78 = arith.constant dense<0xFF800000> : vector<2xf32>
    %205 = vector.multi_reduction <maximumf>, %204, %cst_78 [1] : vector<2x10xf32> to vector<2xf32>
    %206 = vector.shape_cast %205 : vector<2xf32> to vector<2x1xf32>
    %207 = vector.broadcast %206 : vector<2x1xf32> to vector<2x10xf32>
    %208 = arith.subf %204, %207 : vector<2x10xf32>
    %209 = vector.broadcast %206 : vector<2x1xf32> to vector<2x10xf32>
    %210 = arith.subf %204, %209 : vector<2x10xf32>
    %211 = math.exp %210 : vector<2x10xf32>
    %cst_79 = arith.constant dense<0.000000e+00> : vector<2xf32>
    %212 = vector.multi_reduction <add>, %211, %cst_79 [1] : vector<2x10xf32> to vector<2xf32>
    %213 = vector.shape_cast %212 : vector<2xf32> to vector<2x1xf32>
    %214 = math.log %213 : vector<2x1xf32>
    %215 = vector.broadcast %214 : vector<2x1xf32> to vector<2x10xf32>
    %216 = arith.subf %208, %215 : vector<2x10xf32>
    %cst_80 = arith.constant 2.500000e-01 : f32
    %217 = vector.broadcast %cst_80 : f32 to vector<2x10xf32>
    %218 = arith.mulf %77, %217 : vector<2x10xf32>
    %cst_81 = arith.constant dense<0xFF800000> : vector<2xf32>
    %219 = vector.multi_reduction <maximumf>, %218, %cst_81 [1] : vector<2x10xf32> to vector<2xf32>
    %220 = vector.shape_cast %219 : vector<2xf32> to vector<2x1xf32>
    %221 = vector.broadcast %220 : vector<2x1xf32> to vector<2x10xf32>
    %222 = arith.subf %218, %221 : vector<2x10xf32>
    %223 = vector.broadcast %220 : vector<2x1xf32> to vector<2x10xf32>
    %224 = arith.subf %218, %223 : vector<2x10xf32>
    %225 = math.exp %224 : vector<2x10xf32>
    %cst_82 = arith.constant dense<0.000000e+00> : vector<2xf32>
    %226 = vector.multi_reduction <add>, %225, %cst_82 [1] : vector<2x10xf32> to vector<2xf32>
    %227 = vector.shape_cast %226 : vector<2xf32> to vector<2x1xf32>
    %228 = math.log %227 : vector<2x1xf32>
    %229 = vector.broadcast %228 : vector<2x1xf32> to vector<2x10xf32>
    %230 = arith.subf %222, %229 : vector<2x10xf32>
    %231 = math.exp %230 : vector<2x10xf32>
    %232 = arith.subf %230, %216 : vector<2x10xf32>
    %233 = arith.mulf %231, %232 : vector<2x10xf32>
    %cst_83 = arith.constant dense<0.000000e+00> : vector<2xf32>
    %234 = vector.multi_reduction <add>, %233, %cst_83 [1] : vector<2x10xf32> to vector<2xf32>
    %235 = vector.shape_cast %234 : vector<2xf32> to vector<2x1xf32>
    %cst_84 = arith.constant dense<0.000000e+00> : vector<1xf32>
    %236 = vector.multi_reduction <add>, %235, %cst_84 [0] : vector<2x1xf32> to vector<1xf32>
    %237 = vector.shape_cast %236 : vector<1xf32> to vector<1x1xf32>
    %cst_85 = arith.constant 8.000000e+00 : f32
    %238 = vector.broadcast %cst_85 : f32 to vector<1x1xf32>
    %239 = arith.mulf %237, %238 : vector<1x1xf32>
    %240 = arith.addf %202, %239 : vector<1x1xf32>
    %c0_86 = arith.constant 0 : index
    %c0_87 = arith.constant 0 : index
    %241 = vector.load %arg15[%c0_86, %c0_87] : memref<2x10xf32, #tpu.memory_space<vmem>>, vector<2x10xf32>
    tpu.vector_store %arg15[%c0_86, %c0_87], %5 {strides = array<i32>} : memref<2x10xf32, #tpu.memory_space<vmem>>, vector<2x10xf32>,
    %c0_88 = arith.constant 0 : index
    %c0_89 = arith.constant 0 : index
    %242 = vector.load %arg16[%c0_88, %c0_89] : memref<2x10xf32, #tpu.memory_space<vmem>>, vector<2x10xf32>
    tpu.vector_store %arg16[%c0_88, %c0_89], %11 {strides = array<i32>} : memref<2x10xf32, #tpu.memory_space<vmem>>, vector<2x10xf32>,
    %c0_90 = arith.constant 0 : index
    %c0_91 = arith.constant 0 : index
    %243 = vector.load %arg17[%c0_90, %c0_91] : memref<2x10xf32, #tpu.memory_space<vmem>>, vector<2x10xf32>
    tpu.vector_store %arg17[%c0_90, %c0_91], %50 {strides = array<i32>} : memref<2x10xf32, #tpu.memory_space<vmem>>, vector<2x10xf32>,
    %c0_92 = arith.constant 0 : index
    %c0_93 = arith.constant 0 : index
    %244 = vector.load %arg18[%c0_92, %c0_93] : memref<2x10xf32, #tpu.memory_space<vmem>>, vector<2x10xf32>
    tpu.vector_store %arg18[%c0_92, %c0_93], %77 {strides = array<i32>} : memref<2x10xf32, #tpu.memory_space<vmem>>, vector<2x10xf32>,
    %245 = arith.addf %122, %165 : vector<1x1xf32>
    %cst_94 = arith.constant 1.000000e+00 : f32
    %246 = vector.broadcast %cst_94 : f32 to vector<1x1xf32>
    %247 = arith.mulf %246, %240 : vector<1x1xf32>
    %248 = arith.addf %245, %247 : vector<1x1xf32>
    %c0_95 = arith.constant 0 : index
    %c0_96 = arith.constant 0 : index
    %249 = vector.load %arg19[%c0_95, %c0_96] : memref<1x1xf32, #tpu.memory_space<vmem>>, vector<1x1xf32>
    tpu.vector_store %arg19[%c0_95, %c0_96], %248 {strides = array<i32>} : memref<1x1xf32, #tpu.memory_space<vmem>>, vector<1x1xf32>,
    return
  }
  func.func @transform_0(%arg0: i32) -> (i32, i32) {
    %c0_i32 = arith.constant 0 : i32
    %c0_i32_0 = arith.constant 0 : i32
    %c0_i32_1 = arith.constant 0 : i32
    return %c0_i32, %c0_i32_0 : i32, i32
  }
  func.func @transform_1(%arg0: i32) -> (i32, i32) {
    %c0_i32 = arith.constant 0 : i32
    %c0_i32_0 = arith.constant 0 : i32
    %c0_i32_1 = arith.constant 0 : i32
    return %c0_i32, %c0_i32_0 : i32, i32
  }
  func.func @transform_2(%arg0: i32) -> (i32, i32) {
    %c0_i32 = arith.constant 0 : i32
    %c0_i32_0 = arith.constant 0 : i32
    %c0_i32_1 = arith.constant 0 : i32
    return %c0_i32, %c0_i32_0 : i32, i32
  }
  func.func @transform_3(%arg0: i32) -> (i32, i32) {
    %c0_i32 = arith.constant 0 : i32
    %c0_i32_0 = arith.constant 0 : i32
    %c0_i32_1 = arith.constant 0 : i32
    return %c0_i32, %c0_i32_0 : i32, i32
  }
  func.func @transform_4(%arg0: i32) -> (i32, i32) {
    %c0_i32 = arith.constant 0 : i32
    %c0_i32_0 = arith.constant 0 : i32
    %c0_i32_1 = arith.constant 0 : i32
    return %c0_i32, %c0_i32_0 : i32, i32
  }
  func.func @transform_5(%arg0: i32) -> (i32, i32) {
    %c0_i32 = arith.constant 0 : i32
    %c0_i32_0 = arith.constant 0 : i32
    %c0_i32_1 = arith.constant 0 : i32
    return %c0_i32, %c0_i32_0 : i32, i32
  }
  func.func @transform_6(%arg0: i32) -> (i32, i32) {
    %c0_i32 = arith.constant 0 : i32
    %c0_i32_0 = arith.constant 0 : i32
    %c0_i32_1 = arith.constant 0 : i32
    return %c0_i32, %c0_i32_0 : i32, i32
  }
  func.func @transform_7(%arg0: i32) -> (i32, i32) {
    %c0_i32 = arith.constant 0 : i32
    %c0_i32_0 = arith.constant 0 : i32
    %c0_i32_1 = arith.constant 0 : i32
    return %c0_i32, %c0_i32_0 : i32, i32
  }
  func.func @transform_8(%arg0: i32) -> (i32, i32) {
    %c0_i32 = arith.constant 0 : i32
    %c0_i32_0 = arith.constant 0 : i32
    %c0_i32_1 = arith.constant 0 : i32
    return %c0_i32, %c0_i32_0 : i32, i32
  }
  func.func @transform_9(%arg0: i32) -> (i32, i32) {
    %c0_i32 = arith.constant 0 : i32
    %c0_i32_0 = arith.constant 0 : i32
    %c0_i32_1 = arith.constant 0 : i32
    return %c0_i32, %c0_i32_0 : i32, i32
  }
  func.func @transform_10(%arg0: i32) -> (i32, i32) {
    %c0_i32 = arith.constant 0 : i32
    %c0_i32_0 = arith.constant 0 : i32
    %c0_i32_1 = arith.constant 0 : i32
    return %c0_i32, %c0_i32_0 : i32, i32
  }
  func.func @transform_11(%arg0: i32) -> (i32, i32) {
    %c0_i32 = arith.constant 0 : i32
    %c0_i32_0 = arith.constant 0 : i32
    %c0_i32_1 = arith.constant 0 : i32
    return %c0_i32, %c0_i32_0 : i32, i32
  }
  func.func @transform_12(%arg0: i32) -> (i32, i32) {
    %c0_i32 = arith.constant 0 : i32
    %c0_i32_0 = arith.constant 0 : i32
    %c0_i32_1 = arith.constant 0 : i32
    return %c0_i32, %c0_i32_0 : i32, i32
  }
  func.func @transform_13(%arg0: i32) -> (i32, i32) {
    %c0_i32 = arith.constant 0 : i32
    %c0_i32_0 = arith.constant 0 : i32
    %c0_i32_1 = arith.constant 0 : i32
    return %c0_i32, %c0_i32_0 : i32, i32
  }
  func.func @transform_14(%arg0: i32) -> (i32, i32) {
    %c0_i32 = arith.constant 0 : i32
    %c0_i32_0 = arith.constant 0 : i32
    %c0_i32_1 = arith.constant 0 : i32
    return %c0_i32, %c0_i32_0 : i32, i32
  }
  func.func @transform_15(%arg0: i32) -> (i32, i32) {
    %c0_i32 = arith.constant 0 : i32
    %c0_i32_0 = arith.constant 0 : i32
    %c0_i32_1 = arith.constant 0 : i32
    return %c0_i32, %c0_i32_0 : i32, i32
  }
  func.func @transform_16(%arg0: i32) -> (i32, i32) {
    %c0_i32 = arith.constant 0 : i32
    %c0_i32_0 = arith.constant 0 : i32
    %c0_i32_1 = arith.constant 0 : i32
    return %c0_i32, %c0_i32_0 : i32, i32
  }
  func.func @transform_17(%arg0: i32) -> (i32, i32) {
    %c0_i32 = arith.constant 0 : i32
    %c0_i32_0 = arith.constant 0 : i32
    %c0_i32_1 = arith.constant 0 : i32
    return %c0_i32, %c0_i32_0 : i32, i32
  }
  func.func @transform_18(%arg0: i32) -> (i32, i32) {
    %c0_i32 = arith.constant 0 : i32
    %c0_i32_0 = arith.constant 0 : i32
    %c0_i32_1 = arith.constant 0 : i32
    return %c0_i32, %c0_i32_0 : i32, i32
  }
}

</mosaic_0001>

<llo_original>
// kernel: _lambda_.2
$region0: #{_lambda_.2}
  #allocation0 [shape = 'u32[]', space=smem, size = 0x4, offset = 0x4, fixed_abs, tag = 'smem constant byte address 0x4 - core index']
  #allocation1 [shape = 'u32[144,128]{1,0:T(1,128)}', space=vmem, size = 0x12000, scoped, tag = 'internal scratch']
  #allocation2 [shape = 'f32[32,1]{1,0:T(8,128)}', space=vmem, size = 0x4000, scoped, tag = 'scratch operand']
  #allocation3 [shape = 'f32[64,1]{1,0:T(8,128)}', space=vmem, size = 0x8000, scoped, tag = 'scratch operand']
  %s0 = inlined_call_operand.vmem [shape: bf16[10,4,256], index: 0, kind: input, shape index: {}]
  %s1 = inlined_call_operand.vmem [shape: bf16[32,4], index: 1, kind: input, shape index: {}]
  %s2 = inlined_call_operand.vmem [shape: f32[32,1], index: 2, kind: input, shape index: {}]
  %s3 = inlined_call_operand.vmem [shape: bf16[64,32], index: 3, kind: input, shape index: {}]
  %s4 = inlined_call_operand.vmem [shape: f32[64,1], index: 4, kind: input, shape index: {}]
  %s5 = inlined_call_operand.vmem [shape: bf16[10,32,256], index: 5, kind: output, shape index: {0}]
  %s6 = inlined_call_operand.vmem [shape: bf16[10,64,256], index: 6, kind: output, shape index: {1}]
  %s7 = inlined_call_operand.vmem [shape: f32[10,32,1], index: 7, kind: output, shape index: {2}]
  %s8 = inlined_call_operand.vmem [shape: f32[10,64,1], index: 8, kind: output, shape index: {3}]
  %9 = xla_tuple %s5, %s6, %s7, %s8
  %s10 = sld [smem:[#allocation0]]
  $region85: #{_lambda_.2} parent=0
    _
  %s12 = ssub.s32 1, %s10
  %s13 = scalar_select 0, %s12, %s10
  loop: start=0, step=1, limit=12
  $region2: #{_lambda_.2} parent=0 // loop_pre_header
    _
  $region3: #{_lambda_.2} parent=0 // loop_header
    %s15 = sphi 0, %s19
    %p16 = scmp.ge.s32.totalorder %s15, 12
    %s22 = sphi 0, %s34
    %s23 = sphi 0, %s30
    %s24 = sphi 0, %s22
    %s25 = sphi 0, %s23
    %s26 = sphi 0, %s24
    %s27 = sphi 0, %s25
    %s39 = sphi 0, %s41
    %s42 = sphi 0, %s39
    %s43 = sphi 0, %s42
    %s59 = sphi 0, %s43
    %s63 = sphi 0, %s63
    %s65 = sphi 0, %s63
    %s66 = sphi 0, %s65
    %s80 = sphi 0, %s66
    %s84 = sphi 0, %s84
    %s86 = sphi 0, %s84
    %s87 = sphi 0, %s86
    %s101 = sphi 0, %s87
    %s105 = sphi 0, %s105
    %s107 = sphi 0, %s105
    %s108 = sphi 0, %s107
    %s122 = sphi 0, %s108
    %s126 = sphi 0, %s126
    %s128 = sphi 0, %s126
    %s129 = sphi 0, %s128
    %s143 = sphi 0, %s129
    %s151 = sphi 0, %s153
    %s154 = sphi 0, %s151
    %s155 = sphi 0, %s154
    %s171 = sphi 0, %s155
    %s179 = sphi 0, %s181
    %s182 = sphi 0, %s179
    %s183 = sphi 0, %s182
    %s199 = sphi 0, %s183
    %s205 = sphi 0, %s207
    %s208 = sphi 0, %s205
    %s209 = sphi 0, %s208
    %s225 = sphi 0, %s209
    %s231 = sphi 0, %s233
    %s234 = sphi 0, %s231
    %s235 = sphi 0, %s234
    %s251 = sphi 0, %s235
  $region4: #{_lambda_.2} parent=0 // loop_header_branch
    %18 = sbr.rel (%p16) target = $region8
  $region5: #{_lambda_.2} parent=0 // loop_body
    %s20 = ssub.s32 %s15, 1
    %s21 = ssub.s32 %s15, 2
    %s28 = sadd.s32 1, %s23
    %p29 = scmp.ge.s32.totalorder %s28, 1
    %s30 = scalar_select %p29, 0, %s28
    %s31 = sadd.s32 1, %s22
    %s32 = scalar_select %p29, %s31, %s22
    %p33 = scmp.ge.s32.totalorder %s32, 10
    %s34 = scalar_select %p33, 0, %s32
    %s35 = ssub.s32 %s22, %s34
    %s36 = ssub.s32 %s23, %s30
    %s37 = sor.u32 %s35, %s36
    %p38 = scmp.eq.s32.totalorder %s37, 0
    %s40 = sadd.s32 %s39, 1
    %s41 = scalar_select %p38, %s39, %s40
    %p44 = pneg %p38
    %p45 = scmp.eq.s32.totalorder %s15, 9
    %p46 = por %p44, %p45
    %p47 = scmp.ne.s32.totalorder %s39, %s42
    %p48 = scmp.eq.s32.totalorder %s15, 0
    %p49 = por %p47, %p48
    %p50 = scmp.ne.s32.totalorder %s39, %s42
    %p51 = scmp.eq.s32.totalorder %s20, 9
    %p52 = por %p50, %p51
    %p53 = scmp.ne.s32.totalorder %s42, %s43
    %p54 = scmp.eq.s32.totalorder %s20, 0
    %p55 = por %p53, %p54
    %p56 = scmp.ne.s32.totalorder %s42, %s43
    %p57 = scmp.eq.s32.totalorder %s21, 9
    %p58 = por %p56, %p57
    %p60 = scmp.ne.s32.totalorder %s43, %s59
    %p61 = scmp.eq.s32.totalorder %s21, 0
    %p62 = por %p60, %p61
    %s64 = sadd.s32 %s63, 1
    %p67 = scmp.eq.s32.totalorder %s15, 9
    %p68 = scmp.ne.s32.totalorder %s63, %s65
    %p69 = scmp.eq.s32.totalorder %s15, 0
    %p70 = por %p68, %p69
    %p71 = scmp.ne.s32.totalorder %s63, %s65
    %p72 = scmp.eq.s32.totalorder %s20, 9
    %p73 = por %p71, %p72
    %p74 = scmp.ne.s32.totalorder %s65, %s66
    %p75 = scmp.eq.s32.totalorder %s20, 0
    %p76 = por %p74, %p75
    %p77 = scmp.ne.s32.totalorder %s65, %s66
    %p78 = scmp.eq.s32.totalorder %s21, 9
    %p79 = por %p77, %p78
    %p81 = scmp.ne.s32.totalorder %s66, %s80
    %p82 = scmp.eq.s32.totalorder %s21, 0
    %p83 = por %p81, %p82
    %s85 = sadd.s32 %s84, 1
    %p88 = scmp.eq.s32.totalorder %s15, 9
    %p89 = scmp.ne.s32.totalorder %s84, %s86
    %p90 = scmp.eq.s32.totalorder %s15, 0
    %p91 = por %p89, %p90
    %p92 = scmp.ne.s32.totalorder %s84, %s86
    %p93 = scmp.eq.s32.totalorder %s20, 9
    %p94 = por %p92, %p93
    %p95 = scmp.ne.s32.totalorder %s86, %s87
    %p96 = scmp.eq.s32.totalorder %s20, 0
    %p97 = por %p95, %p96
    %p98 = scmp.ne.s32.totalorder %s86, %s87
    %p99 = scmp.eq.s32.totalorder %s21, 9
    %p100 = por %p98, %p99
    %p102 = scmp.ne.s32.totalorder %s87, %s101
    %p103 = scmp.eq.s32.totalorder %s21, 0
    %p104 = por %p102, %p103
    %s106 = sadd.s32 %s105, 1
    %p109 = scmp.eq.s32.totalorder %s15, 9
    %p110 = scmp.ne.s32.totalorder %s105, %s107
    %p111 = scmp.eq.s32.totalorder %s15, 0
    %p112 = por %p110, %p111
    %p113 = scmp.ne.s32.totalorder %s105, %s107
    %p114 = scmp.eq.s32.totalorder %s20, 9
    %p115 = por %p113, %p114
    %p116 = scmp.ne.s32.totalorder %s107, %s108
    %p117 = scmp.eq.s32.totalorder %s20, 0
    %p118 = por %p116, %p117
    %p119 = scmp.ne.s32.totalorder %s107, %s108
    %p120 = scmp.eq.s32.totalorder %s21, 9
    %p121 = por %p119, %p120
    %p123 = scmp.ne.s32.totalorder %s108, %s122
    %p124 = scmp.eq.s32.totalorder %s21, 0
    %p125 = por %p123, %p124
    %s127 = sadd.s32 %s126, 1
    %p130 = scmp.eq.s32.totalorder %s15, 9
    %p131 = scmp.ne.s32.totalorder %s126, %s128
    %p132 = scmp.eq.s32.totalorder %s15, 0
    %p133 = por %p131, %p132
    %p134 = scmp.ne.s32.totalorder %s126, %s128
    %p135 = scmp.eq.s32.totalorder %s20, 9
    %p136 = por %p134, %p135
    %p137 = scmp.ne.s32.totalorder %s128, %s129
    %p138 = scmp.eq.s32.totalorder %s20, 0
    %p139 = por %p137, %p138
    %p140 = scmp.ne.s32.totalorder %s128, %s129
    %p141 = scmp.eq.s32.totalorder %s21, 9
    %p142 = por %p140, %p141
    %p144 = scmp.ne.s32.totalorder %s129, %s143
    %p145 = scmp.eq.s32.totalorder %s21, 0
    %p146 = por %p144, %p145
    %s147 = ssub.s32 %s22, %s34
    %s148 = ssub.s32 %s23, %s30
    %s149 = sor.u32 %s147, %s148
    %p150 = scmp.eq.s32.totalorder %s149, 0
    %s152 = sadd.s32 %s151, 1
    %s153 = scalar_select %p150, %s151, %s152
    %p156 = pneg %p150
    %p157 = scmp.eq.s32.totalorder %s15, 9
    %p158 = por %p156, %p157
    %p159 = scmp.ne.s32.totalorder %s151, %s154
    %p160 = scmp.eq.s32.totalorder %s15, 0
    %p161 = por %p159, %p160
    %p162 = scmp.ne.s32.totalorder %s151, %s154
    %p163 = scmp.eq.s32.totalorder %s20, 9
    %p164 = por %p162, %p163
    %p165 = scmp.ne.s32.totalorder %s154, %s155
    %p166 = scmp.eq.s32.totalorder %s20, 0
    %p167 = por %p165, %p166
    %p168 = scmp.ne.s32.totalorder %s154, %s155
    %p169 = scmp.eq.s32.totalorder %s21, 9
    %p170 = por %p168, %p169
    %p172 = scmp.ne.s32.totalorder %s155, %s171
    %p173 = scmp.eq.s32.totalorder %s21, 0
    %p174 = por %p172, %p173
    %s175 = ssub.s32 %s22, %s34
    %s176 = ssub.s32 %s23, %s30
    %s177 = sor.u32 %s175, %s176
    %p178 = scmp.eq.s32.totalorder %s177, 0
    %s180 = sadd.s32 %s179, 1
    %s181 = scalar_select %p178, %s179, %s180
    %p184 = pneg %p178
    %p185 = scmp.eq.s32.totalorder %s15, 9
    %p186 = por %p184, %p185
    %p187 = scmp.ne.s32.totalorder %s179, %s182
    %p188 = scmp.eq.s32.totalorder %s15, 0
    %p189 = por %p187, %p188
    %p190 = scmp.ne.s32.totalorder %s179, %s182
    %p191 = scmp.eq.s32.totalorder %s20, 9
    %p192 = por %p190, %p191
    %p193 = scmp.ne.s32.totalorder %s182, %s183
    %p194 = scmp.eq.s32.totalorder %s20, 0
    %p195 = por %p193, %p194
    %p196 = scmp.ne.s32.totalorder %s182, %s183
    %p197 = scmp.eq.s32.totalorder %s21, 9
    %p198 = por %p196, %p197
    %p200 = scmp.ne.s32.totalorder %s183, %s199
    %p201 = scmp.eq.s32.totalorder %s21, 0
    %p202 = por %p200, %p201
    %s203 = ssub.s32 %s22, %s34
    %p204 = scmp.eq.s32.totalorder %s203, 0
    %s206 = sadd.s32 %s205, 1
    %s207 = scalar_select %p204, %s205, %s206
    %p210 = pneg %p204
    %p211 = scmp.eq.s32.totalorder %s15, 9
    %p212 = por %p210, %p211
    %p213 = scmp.ne.s32.totalorder %s205, %s208
    %p214 = scmp.eq.s32.totalorder %s15, 0
    %p215 = por %p213, %p214
    %p216 = scmp.ne.s32.totalorder %s205, %s208
    %p217 = scmp.eq.s32.totalorder %s20, 9
    %p218 = por %p216, %p217
    %p219 = scmp.ne.s32.totalorder %s208, %s209
    %p220 = scmp.eq.s32.totalorder %s20, 0
    %p221 = por %p219, %p220
    %p222 = scmp.ne.s32.totalorder %s208, %s209
    %p223 = scmp.eq.s32.totalorder %s21, 9
    %p224 = por %p222, %p223
    %p226 = scmp.ne.s32.totalorder %s209, %s225
    %p227 = scmp.eq.s32.totalorder %s21, 0
    %p228 = por %p226, %p227
    %s229 = ssub.s32 %s22, %s34
    %p230 = scmp.eq.s32.totalorder %s229, 0
    %s232 = sadd.s32 %s231, 1
    %s233 = scalar_select %p230, %s231, %s232
    %p236 = pneg %p230
    %p237 = scmp.eq.s32.totalorder %s15, 9
    %p238 = por %p236, %p237
    %p239 = scmp.ne.s32.totalorder %s231, %s234
    %p240 = scmp.eq.s32.totalorder %s15, 0
    %p241 = por %p239, %p240
    %p242 = scmp.ne.s32.totalorder %s231, %s234
    %p243 = scmp.eq.s32.totalorder %s20, 9
    %p244 = por %p242, %p243
    %p245 = scmp.ne.s32.totalorder %s234, %s235
    %p246 = scmp.eq.s32.totalorder %s20, 0
    %p247 = por %p245, %p246
    %p248 = scmp.ne.s32.totalorder %s234, %s235
    %p249 = scmp.eq.s32.totalorder %s21, 9
    %p250 = por %p248, %p249
    %p252 = scmp.ne.s32.totalorder %s235, %s251
    %p253 = scmp.eq.s32.totalorder %s21, 0
    %p254 = por %p252, %p253
    %p255 = scmp.le.s32.totalorder 1, %s15
    %p256 = scmp.lt.s32.totalorder %s15, 11
    %p257 = pnand %p255, %p256
    %p258 = pneg %p257
    // Predicated region
    $region9: #{_lambda_.2} parent=5 // pred_check
      _
    $region10: #{_lambda_.2} parent=5 // pred_check_branch
      %260 = sbr.rel (%p257) target = $region12
    $region11: #{_lambda_.2} parent=5 // pred_region
      %s261 = ssub.s32 %s15, 1
      // Predicated region
      $region13: #{_lambda_.2} parent=11 // pred_check
        %p262 = pneg %p76
      $region14: #{_lambda_.2} parent=11 // pred_check_branch
        %264 = sbr.rel (%p262) target = $region16
      $region15: #{_lambda_.2} parent=11 // pred_region
        _
      $region16: #{_lambda_.2} parent=11 // pred_fallthru
        _
      // Predicated region
      $region17: #{_lambda_.2} parent=11 // pred_check
        %p265 = pneg %p97
      $region18: #{_lambda_.2} parent=11 // pred_check_branch
        %267 = sbr.rel (%p265) target = $region20
      $region19: #{_lambda_.2} parent=11 // pred_region
        _
      $region20: #{_lambda_.2} parent=11 // pred_fallthru
        _
      // Predicated region
      $region21: #{_lambda_.2} parent=11 // pred_check
        %p268 = pneg %p118
      $region22: #{_lambda_.2} parent=11 // pred_check_branch
        %270 = sbr.rel (%p268) target = $region24
      $region23: #{_lambda_.2} parent=11 // pred_region
        _
      $region24: #{_lambda_.2} parent=11 // pred_fallthru
        _
      // Predicated region
      $region25: #{_lambda_.2} parent=11 // pred_check
        %p271 = pneg %p139
      $region26: #{_lambda_.2} parent=11 // pred_check_branch
        %273 = sbr.rel (%p271) target = $region28
      $region27: #{_lambda_.2} parent=11 // pred_region
        _
      $region28: #{_lambda_.2} parent=11 // pred_fallthru
        _
    $region12: #{_lambda_.2} parent=5 // pred_fallthru
      _
    %p274 = scmp.lt.s32.totalorder %s15, 10
    // Predicated region
    $region29: #{_lambda_.2} parent=5 // pred_check
      %p275 = pneg %p274
    $region30: #{_lambda_.2} parent=5 // pred_check_branch
      %277 = sbr.rel (%p275) target = $region32
    $region31: #{_lambda_.2} parent=5 // pred_region
      // Predicated region
      $region33: #{_lambda_.2} parent=31 // pred_check
        %p278 = pneg %p49
      $region34: #{_lambda_.2} parent=31 // pred_check_branch
        %280 = sbr.rel (%p278) target = $region36
      $region35: #{_lambda_.2} parent=31 // pred_region
        %s281 = smul.u32 2, %s23
        %p282 = scmp.lt.s32.totalorder %s22, 9
        %s283 = scalar_select %p282, %s22, 9
        %p284 = scmp.lt.s32.totalorder %s281, 1
        %s285 = scalar_select %p284, %s281, 1
        %s286 = smul.addr %s283, 2
        %s287 = sadd.s32 %s285, %s286
        %s288 = smul.addr %s287, 2
        %s289 = scalar_lea.vmem %s0, %s288
        %s290 = smul.u32 2, %s23
      $region36: #{_lambda_.2} parent=31 // pred_fallthru
        _
    $region32: #{_lambda_.2} parent=5 // pred_fallthru
      _
    %p291 = scmp.le.s32.totalorder 1, %s15
    %p292 = scmp.lt.s32.totalorder %s15, 11
    %p293 = pnand %p291, %p292
    %p294 = pneg %p293
    // Predicated region
    $region37: #{_lambda_.2} parent=5 // pred_check
      _
    $region38: #{_lambda_.2} parent=5 // pred_check_branch
      %296 = sbr.rel (%p293) target = $region40
    $region39: #{_lambda_.2} parent=5 // pred_region
      %s297 = ssub.s32 %s15, 1
      %s298 = smul.u32 2, %s25
      %p299 = scmp.lt.s32.totalorder %s24, 9
      %s300 = scalar_select %p299, %s24, 9
      %p301 = scmp.lt.s32.totalorder %s298, 1
      %s302 = scalar_select %p301, %s298, 1
      %s303 = smul.addr %s300, 2
      %s304 = sadd.s32 %s302, %s303
      %s305 = smul.addr %s304, 2
      %s306 = scalar_lea.vmem %s0, %s305
      %p307 = pneg %p55
      %p308 = pneg %p52
      %p309 = pneg %p76
      %p310 = pneg %p73
      %p311 = pneg %p97
      %p312 = pneg %p94
      %p313 = pneg %p118
      %p314 = pneg %p115
      %p315 = pneg %p139
      %p316 = pneg %p136
      %p317 = pneg %p167
      %p318 = pneg %p164
      %s319 = smul.u32 2, %s25
      %p320 = scmp.lt.s32.totalorder %s24, 9
      %s321 = scalar_select %p320, %s24, 9
      %p322 = scmp.lt.s32.totalorder %s319, 1
      %s323 = scalar_select %p322, %s319, 1
      %s324 = smul.addr %s321, 8
      %s325 = sadd.s32 %s323, %s324
      %s326 = smul.addr %s325, 4
      %s327 = scalar_lea.vmem %s5, %s326
      %p328 = pneg %p195
      %p329 = pneg %p192
      %s330 = smul.u32 2, %s25
      %p331 = scmp.lt.s32.totalorder %s24, 9
      %s332 = scalar_select %p331, %s24, 9
      %p333 = scmp.lt.s32.totalorder %s330, 1
      %s334 = scalar_select %p333, %s330, 1
      %s335 = smul.addr %s332, 16
      %s336 = sadd.s32 %s334, %s335
      %s337 = smul.addr %s336, 4
      %s338 = scalar_lea.vmem %s6, %s337
      %p339 = pneg %p221
      %p340 = pneg %p218
      %p341 = scmp.lt.s32.totalorder %s24, 9
      %s342 = scalar_select %p341, %s24, 9
      %s343 = smul.addr %s342, 4
      %s344 = smul.addr %s343, 8
      %s345 = scalar_lea.vmem %s7, %s344
      %p346 = pneg %p247
      %p347 = pneg %p244
      %p348 = scmp.lt.s32.totalorder %s24, 9
      %s349 = scalar_select %p348, %s24, 9
      %s350 = smul.addr %s349, 8
      %s351 = smul.addr %s350, 8
      %s352 = scalar_lea.vmem %s8, %s351
      %s353 = smul.u32 2, %s25
      %p354 = scmp.lt.s32.totalorder %s24, 9
      %s355 = scalar_select %p354, %s24, 9
      %p356 = scmp.lt.s32.totalorder %s353, 1
      %s357 = scalar_select %p356, %s353, 1
      %s358 = smul.addr %s355, 2
      %s359 = sadd.s32 %s357, %s358
      %s360 = smul.addr %s359, 2
      %s361 = scalar_lea.vmem %s0, %s360
      %s362 = smul.u32 2, %s25
      %s363 = smul.u32 2, %s25
      %p364 = scmp.lt.s32.totalorder %s24, 9
      %s365 = scalar_select %p364, %s24, 9
      %p366 = scmp.lt.s32.totalorder %s363, 1
      %s367 = scalar_select %p366, %s363, 1
      %s368 = smul.addr %s365, 8
      %s369 = sadd.s32 %s367, %s368
      %s370 = smul.addr %s369, 4
      %s371 = scalar_lea.vmem %s5, %s370
      %s372 = smul.u32 2, %s25
      %s373 = smul.u32 2, %s25
      %p374 = scmp.lt.s32.totalorder %s24, 9
      %s375 = scalar_select %p374, %s24, 9
      %p376 = scmp.lt.s32.totalorder %s373, 1
      %s377 = scalar_select %p376, %s373, 1
      %s378 = smul.addr %s375, 16
      %s379 = sadd.s32 %s377, %s378
      %s380 = smul.addr %s379, 4
      %s381 = scalar_lea.vmem %s6, %s380
      %s382 = smul.u32 2, %s25
      %p383 = scmp.lt.s32.totalorder %s24, 9
      %s384 = scalar_select %p383, %s24, 9
      %s385 = smul.addr %s384, 4
      %s386 = smul.addr %s385, 8
      %s387 = scalar_lea.vmem %s7, %s386
      %p388 = scmp.lt.s32.totalorder %s24, 9
      %s389 = scalar_select %p388, %s24, 9
      %s390 = smul.addr %s389, 8
      %s391 = smul.addr %s390, 8
      %s392 = scalar_lea.vmem %s8, %s391
      %p394 = scmp.eq.s32.totalorder %s25, 0
      // Predicated region
      $region41: #{_lambda_.2} parent=39 // pred_check
        %p395 = pneg %p394
      $region42: #{_lambda_.2} parent=39 // pred_check_branch
        %397 = sbr.rel (%p395) target = $region44
      $region43: #{_lambda_.2} parent=39 // pred_region
        %vm398 = vcmask 7168
        %399 = vst.msk [vmem:[#allocation2] sm:$0xff] %vm398, 0.0
        %400 = vst.msk [vmem:[#allocation2 + $0x8] sm:$0xff] %vm398, 0.0
        %401 = vst.msk [vmem:[#allocation2 + $0x10] sm:$0xff] %vm398, 0.0
        %402 = vst.msk [vmem:[#allocation2 + $0x18] sm:$0xff] %vm398, 0.0
        %403 = vst.msk [vmem:[#allocation3] sm:$0xff] %vm398, 0.0
        %404 = vst.msk [vmem:[#allocation3 + $0x8] sm:$0xff] %vm398, 0.0
        %405 = vst.msk [vmem:[#allocation3 + $0x10] sm:$0xff] %vm398, 0.0
        %406 = vst.msk [vmem:[#allocation3 + $0x18] sm:$0xff] %vm398, 0.0
        %407 = vst.msk [vmem:[#allocation3 + $0x20] sm:$0xff] %vm398, 0.0
        %408 = vst.msk [vmem:[#allocation3 + $0x28] sm:$0xff] %vm398, 0.0
        %409 = vst.msk [vmem:[#allocation3 + $0x30] sm:$0xff] %vm398, 0.0
        %410 = vst.msk [vmem:[#allocation3 + $0x38] sm:$0xff] %vm398, 0.0
      $region44: #{_lambda_.2} parent=39 // pred_fallthru
        _
      %v411 = vld [vmem:[%s1] sm:$0xf]
      %v412 = vld [vmem:[%s1 + $0x4] sm:$0xf]
      %v413 = vld [vmem:[%s1 + $0x8] sm:$0xf]
      %v414 = vld [vmem:[%s1 + $0xc] sm:$0xf]
      %v415 = vld [vmem:[%s361] sm:$0xf]
      %v416 = vld [vmem:[%s2] sm:$0xff]
      %v417 = vld [vmem:[%s2 + $0x8] sm:$0xff]
      %v418 = vld [vmem:[%s2 + $0x10] sm:$0xff]
      %v419 = vld [vmem:[%s2 + $0x18] sm:$0xff]
      %421 = vset.pattern.permute.xlu0 0
      %422 = vperm.xlu0 %421, %v416
      %v423 = vpop.permute.xlu0 %422
      %426 = vset.pattern.permute.xlu0 0
      %427 = vperm.xlu0 %426, %v417
      %v428 = vpop.permute.xlu0 %427
      %431 = vset.pattern.permute.xlu0 0
      %432 = vperm.xlu0 %431, %v418
      %v433 = vpop.permute.xlu0 %432
      %436 = vset.pattern.permute.xlu0 0
      %437 = vperm.xlu0 %436, %v419
      %v438 = vpop.permute.xlu0 %437
      %v444 = vunpack.c.l.b16 %v411
      %v445 = vunpack.c.l.b16 %v412
      %v446 = vunpack.c.l.b16 %v413
      %v447 = vunpack.c.l.b16 %v414
      %v448 = vpack.c.b16 %v445, %v444
      %v449 = vpack.c.b16 %v447, %v446
      %v452 = vunpack.c.l.s4 1983009808
      %v453 = vunpack.c.0.s8 %v452
      %v454 = vlaneseq
      %v455 = vshrl.u32 %v454, 7
      %v456 = vsub.s32 %v453, %v455
      %v457 = vrot.slane %v415, %v456
      %v458 = vcombine.high %v457, %v457
      %vm459 = vcmask 31744
      %v461 = vsel %vm459, %v448, 0
      %v464 = vsel %vm459, %v449, 0
      %vm466 = vcmask 1041408
      %v468 = vsel %vm466, %v457, 0
      %v471 = vsel %vm466, %v458, 0
      %473 = vmatprep.subr.bf16.mxu0 0
      %474 = vmatpush1.bf16.msra.mxu0 0
      %475 = vmatprep.subr.bf16.mxu0 0
      %476 = vmatpush1.bf16.msra.mxu0 0
      %477 = vmatprep.subr.bf16.mxu0 0
      %478 = vmatpush1.bf16.msra.mxu0 0
      %479 = vmatprep.subr.bf16.mxu0 0
      %480 = vmatpush1.bf16.msra.mxu0 0
      %481 = vmatprep.subr.bf16.mxu0 0
      %482 = vmatpush1.bf16.msra.mxu0 0
      %483 = vmatprep.subr.bf16.mxu0 0
      %484 = vmatpush1.bf16.msra.mxu0 0
      %485 = vmatprep.subr.bf16.mxu0 0
      %486 = vmatpush1.bf16.msra.mxu0 0
      %487 = vmatprep.subr.bf16.mxu0 %v471
      %488 = vmatpush1.bf16.msra.mxu0 %v468
      %489 = vmatprep.subr.bf16.mxu0 0
      %490 = vmatpush2.bf16.msra.mxu0 0
      %491 = vmatprep.subr.bf16.mxu0 0
      %492 = vmatpush2.bf16.msra.mxu0 0
      %493 = vmatprep.subr.bf16.mxu0 0
      %494 = vmatpush2.bf16.msra.mxu0 0
      %495 = vmatprep.subr.bf16.mxu0 0
      %496 = vmatpush2.bf16.msra.mxu0 0
      %497 = vmatprep.subr.bf16.mxu0 0
      %498 = vmatpush2.bf16.msra.mxu0 0
      %499 = vmatprep.subr.bf16.mxu0 0
      %500 = vmatpush2.bf16.msra.mxu0 0
      %501 = vmatprep.subr.bf16.mxu0 0
      %502 = vmatpush2.bf16.msra.mxu0 0
      %503 = vmatprep.subr.bf16.mxu0 0
      %504 = vmatpush2.bf16.msra.mxu0 0
      %505 = vmatprep.mubr.bf16.mxu0 0
      %506 = vmatmul.mubr.bf16.gmra.mxu0 %v461
      %v507 = vpop.f32.mrf.mxu0
      %v508 = vadd.f32 %v423, %v507
      %v509 = vpop.f32.mrf.mxu0
      %v510 = vadd.f32 %v423, %v509
      %v511 = vpop.f32.mrf.mxu0
      %v512 = vadd.f32 %v428, %v511
      %v513 = vpop.f32.mrf.mxu0
      %v514 = vadd.f32 %v428, %v513
      %515 = vmatprep.mubr.bf16.mxu0 0
      %516 = vmatmul.mubr.bf16.gmra.mxu0 %v464
      %v517 = vpop.f32.mrf.mxu0
      %v518 = vadd.f32 %v433, %v517
      %v519 = vpop.f32.mrf.mxu0
      %v520 = vadd.f32 %v433, %v519
      %v521 = vpop.f32.mrf.mxu0
      %v522 = vadd.f32 %v438, %v521
      %v523 = vpop.f32.mrf.mxu0
      %v524 = vadd.f32 %v438, %v523
      %525 = vdwg.mxu0
      %v526 = vmax.f32 %v508, 0.0
      %v527 = vmax.f32 %v510, 0.0
      %v528 = vmax.f32 %v512, 0.0
      %v529 = vmax.f32 %v514, 0.0
      %v530 = vmax.f32 %v518, 0.0
      %v531 = vmax.f32 %v520, 0.0
      %v532 = vmax.f32 %v522, 0.0
      %v533 = vmax.f32 %v524, 0.0
      %v534 = vpack.c.bf16 %v528, %v526
      %v535 = vpack.c.bf16 %v529, %v527
      %v536 = vpack.c.bf16 %v532, %v530
      %v537 = vpack.c.bf16 %v533, %v531
      %v542 = vunpack.c.l.b16 %v534
      %v543 = vunpack.c.l.b16 %v535
      %v544 = vunpack.c.h.b16 %v534
      %v545 = vunpack.c.h.b16 %v535
      %v546 = vunpack.c.l.b16 %v536
      %v547 = vunpack.c.l.b16 %v537
      %v548 = vunpack.c.h.b16 %v536
      %v549 = vunpack.c.h.b16 %v537
      %v550 = vpack.c.b16 %v543, %v542
      %v551 = vpack.c.b16 %v545, %v544
      %v552 = vpack.c.b16 %v547, %v546
      %v553 = vpack.c.b16 %v549, %v548
      %558 = vst [vmem:[%s371] sm:$0xff] %v550
      %559 = vst [vmem:[%s371 + $0x8] sm:$0xff] %v551
      %560 = vst [vmem:[%s371 + $0x10] sm:$0xff] %v552
      %561 = vst [vmem:[%s371 + $0x18] sm:$0xff] %v553
      %v562 = vld [vmem:[%s3] sm:$0xf]
      %v563 = vld [vmem:[%s3 + $0x4] sm:$0xf]
      %v564 = vld [vmem:[%s3 + $0x8] sm:$0xf]
      %v565 = vld [vmem:[%s3 + $0xc] sm:$0xf]
      %v566 = vld [vmem:[%s3 + $0x10] sm:$0xf]
      %v567 = vld [vmem:[%s3 + $0x14] sm:$0xf]
      %v568 = vld [vmem:[%s3 + $0x18] sm:$0xf]
      %v569 = vld [vmem:[%s3 + $0x1c] sm:$0xf]
      %v570 = vld [vmem:[%s4] sm:$0xff]
      %v571 = vld [vmem:[%s4 + $0x8] sm:$0xff]
      %v572 = vld [vmem:[%s4 + $0x10] sm:$0xff]
      %v573 = vld [vmem:[%s4 + $0x18] sm:$0xff]
      %v574 = vld [vmem:[%s4 + $0x20] sm:$0xff]
      %v575 = vld [vmem:[%s4 + $0x28] sm:$0xff]
      %v576 = vld [vmem:[%s4 + $0x30] sm:$0xff]
      %v577 = vld [vmem:[%s4 + $0x38] sm:$0xff]
      %579 = vset.pattern.permute.xlu0 0
      %580 = vperm.xlu0 %579, %v570
      %v581 = vpop.permute.xlu0 %580
      %584 = vset.pattern.permute.xlu0 0
      %585 = vperm.xlu0 %584, %v571
      %v586 = vpop.permute.xlu0 %585
      %589 = vset.pattern.permute.xlu0 0
      %590 = vperm.xlu0 %589, %v572
      %v591 = vpop.permute.xlu0 %590
      %594 = vset.pattern.permute.xlu0 0
      %595 = vperm.xlu0 %594, %v573
      %v596 = vpop.permute.xlu0 %595
      %599 = vset.pattern.permute.xlu0 0
      %600 = vperm.xlu0 %599, %v574
      %v601 = vpop.permute.xlu0 %600
      %604 = vset.pattern.permute.xlu0 0
      %605 = vperm.xlu0 %604, %v575
      %v606 = vpop.permute.xlu0 %605
      %609 = vset.pattern.permute.xlu0 0
      %610 = vperm.xlu0 %609, %v576
      %v611 = vpop.permute.xlu0 %610
      %614 = vset.pattern.permute.xlu0 0
      %615 = vperm.xlu0 %614, %v577
      %v616 = vpop.permute.xlu0 %615
      %v626 = vunpack.c.l.b16 %v562
      %v627 = vunpack.c.l.b16 %v563
      %v628 = vunpack.c.l.b16 %v564
      %v629 = vunpack.c.l.b16 %v565
      %v630 = vunpack.c.l.b16 %v566
      %v631 = vunpack.c.l.b16 %v567
      %v632 = vunpack.c.l.b16 %v568
      %v633 = vunpack.c.l.b16 %v569
      %v634 = vpack.c.b16 %v627, %v626
      %v635 = vpack.c.b16 %v629, %v628
      %v636 = vpack.c.b16 %v631, %v630
      %v637 = vpack.c.b16 %v633, %v632
      %vm638 = vcmask 261120
      %v640 = vsel %vm638, %v634, 0
      %v643 = vsel %vm638, %v635, 0
      %v646 = vsel %vm638, %v636, 0
      %v649 = vsel %vm638, %v637, 0
      %651 = vmatprep.subr.bf16.mxu0 0
      %652 = vmatpush1.bf16.msra.mxu0 0
      %653 = vmatprep.subr.bf16.mxu0 0
      %654 = vmatpush1.bf16.msra.mxu0 0
      %655 = vmatprep.subr.bf16.mxu0 0
      %656 = vmatpush1.bf16.msra.mxu0 0
      %657 = vmatprep.subr.bf16.mxu0 0
      %658 = vmatpush1.bf16.msra.mxu0 0
      %659 = vmatprep.subr.bf16.mxu0 0
      %660 = vmatpush1.bf16.msra.mxu0 0
      %661 = vmatprep.subr.bf16.mxu0 0
      %662 = vmatpush1.bf16.msra.mxu0 0
      %663 = vmatprep.subr.bf16.mxu0 %v537
      %664 = vmatpush1.bf16.msra.mxu0 %v536
      %665 = vmatprep.subr.bf16.mxu0 %v535
      %666 = vmatpush1.bf16.msra.mxu0 %v534
      %667 = vmatprep.subr.bf16.mxu0 0
      %668 = vmatpush2.bf16.msra.mxu0 0
      %669 = vmatprep.subr.bf16.mxu0 0
      %670 = vmatpush2.bf16.msra.mxu0 0
      %671 = vmatprep.subr.bf16.mxu0 0
      %672 = vmatpush2.bf16.msra.mxu0 0
      %673 = vmatprep.subr.bf16.mxu0 0
      %674 = vmatpush2.bf16.msra.mxu0 0
      %675 = vmatprep.subr.bf16.mxu0 0
      %676 = vmatpush2.bf16.msra.mxu0 0
      %677 = vmatprep.subr.bf16.mxu0 0
      %678 = vmatpush2.bf16.msra.mxu0 0
      %679 = vmatprep.subr.bf16.mxu0 0
      %680 = vmatpush2.bf16.msra.mxu0 0
      %681 = vmatprep.subr.bf16.mxu0 0
      %682 = vmatpush2.bf16.msra.mxu0 0
      %683 = vmatprep.mubr.bf16.mxu0 0
      %684 = vmatmul.mubr.bf16.gmra.mxu0 %v640
      %v685 = vpop.f32.mrf.mxu0
      %v686 = vadd.f32 %v581, %v685
      %v687 = vpop.f32.mrf.mxu0
      %v688 = vadd.f32 %v581, %v687
      %v689 = vpop.f32.mrf.mxu0
      %v690 = vadd.f32 %v586, %v689
      %v691 = vpop.f32.mrf.mxu0
      %v692 = vadd.f32 %v586, %v691
      %693 = vmatprep.mubr.bf16.mxu0 0
      %694 = vmatmul.mubr.bf16.gmra.mxu0 %v643
      %v695 = vpop.f32.mrf.mxu0
      %v696 = vadd.f32 %v591, %v695
      %v697 = vpop.f32.mrf.mxu0
      %v698 = vadd.f32 %v591, %v697
      %v699 = vpop.f32.mrf.mxu0
      %v700 = vadd.f32 %v596, %v699
      %v701 = vpop.f32.mrf.mxu0
      %v702 = vadd.f32 %v596, %v701
      %703 = vmatprep.mubr.bf16.mxu0 0
      %704 = vmatmul.mubr.bf16.gmra.mxu0 %v646
      %v705 = vpop.f32.mrf.mxu0
      %v706 = vadd.f32 %v601, %v705
      %v707 = vpop.f32.mrf.mxu0
      %v708 = vadd.f32 %v601, %v707
      %v709 = vpop.f32.mrf.mxu0
      %v710 = vadd.f32 %v606, %v709
      %v711 = vpop.f32.mrf.mxu0
      %v712 = vadd.f32 %v606, %v711
      %713 = vmatprep.mubr.bf16.mxu0 0
      %714 = vmatmul.mubr.bf16.gmra.mxu0 %v649
      %v715 = vpop.f32.mrf.mxu0
      %v716 = vadd.f32 %v611, %v715
      %v717 = vpop.f32.mrf.mxu0
      %v718 = vadd.f32 %v611, %v717
      %v719 = vpop.f32.mrf.mxu0
      %v720 = vadd.f32 %v616, %v719
      %v721 = vpop.f32.mrf.mxu0
      %v722 = vadd.f32 %v616, %v721
      %723 = vdwg.mxu0
      %v724 = vmax.f32 %v686, 0.0
      %v725 = vmax.f32 %v688, 0.0
      %v726 = vmax.f32 %v690, 0.0
      %v727 = vmax.f32 %v692, 0.0
      %v728 = vmax.f32 %v696, 0.0
      %v729 = vmax.f32 %v698, 0.0
      %v730 = vmax.f32 %v700, 0.0
      %v731 = vmax.f32 %v702, 0.0
      %v732 = vmax.f32 %v706, 0.0
      %v733 = vmax.f32 %v708, 0.0
      %v734 = vmax.f32 %v710, 0.0
      %v735 = vmax.f32 %v712, 0.0
      %v736 = vmax.f32 %v716, 0.0
      %v737 = vmax.f32 %v718, 0.0
      %v738 = vmax.f32 %v720, 0.0
      %v739 = vmax.f32 %v722, 0.0
      %v740 = vpack.c.bf16 %v726, %v724
      %v741 = vpack.c.bf16 %v727, %v725
      %v742 = vpack.c.bf16 %v730, %v728
      %v743 = vpack.c.bf16 %v731, %v729
      %v744 = vpack.c.bf16 %v734, %v732
      %v745 = vpack.c.bf16 %v735, %v733
      %v746 = vpack.c.bf16 %v738, %v736
      %v747 = vpack.c.bf16 %v739, %v737
      %v756 = vunpack.c.l.b16 %v740
      %v757 = vunpack.c.l.b16 %v741
      %v758 = vunpack.c.h.b16 %v740
      %v759 = vunpack.c.h.b16 %v741
      %v760 = vunpack.c.l.b16 %v742
      %v761 = vunpack.c.l.b16 %v743
      %v762 = vunpack.c.h.b16 %v742
      %v763 = vunpack.c.h.b16 %v743
      %v764 = vunpack.c.l.b16 %v744
      %v765 = vunpack.c.l.b16 %v745
      %v766 = vunpack.c.h.b16 %v744
      %v767 = vunpack.c.h.b16 %v745
      %v768 = vunpack.c.l.b16 %v746
      %v769 = vunpack.c.l.b16 %v747
      %v770 = vunpack.c.h.b16 %v746
      %v771 = vunpack.c.h.b16 %v747
      %v772 = vpack.c.b16 %v757, %v756
      %v773 = vpack.c.b16 %v759, %v758
      %v774 = vpack.c.b16 %v761, %v760
      %v775 = vpack.c.b16 %v763, %v762
      %v776 = vpack.c.b16 %v765, %v764
      %v777 = vpack.c.b16 %v767, %v766
      %v778 = vpack.c.b16 %v769, %v768
      %v779 = vpack.c.b16 %v771, %v770
      %788 = vst [vmem:[%s381] sm:$0xff] %v772
      %789 = vst [vmem:[%s381 + $0x8] sm:$0xff] %v773
      %790 = vst [vmem:[%s381 + $0x10] sm:$0xff] %v774
      %791 = vst [vmem:[%s381 + $0x18] sm:$0xff] %v775
      %792 = vst [vmem:[%s381 + $0x20] sm:$0xff] %v776
      %793 = vst [vmem:[%s381 + $0x28] sm:$0xff] %v777
      %794 = vst [vmem:[%s381 + $0x30] sm:$0xff] %v778
      %795 = vst [vmem:[%s381 + $0x38] sm:$0xff] %v779
      %v796 = vld [vmem:[#allocation2] sm:$0xff]
      %v797 = vld [vmem:[#allocation2 + $0x8] sm:$0xff]
      %v798 = vld [vmem:[#allocation2 + $0x10] sm:$0xff]
      %v799 = vld [vmem:[#allocation2 + $0x18] sm:$0xff]
      %v800 = vadd.f32 %v526, %v527
      %801 = vadd.xlane.f32.xlu0 %v800
      %v802 = vpop.xlane.xlu0 %801
      %v803 = vadd.f32 %v528, %v529
      %804 = vadd.xlane.f32.xlu0 %v803
      %v805 = vpop.xlane.xlu0 %804
      %v806 = vadd.f32 %v530, %v531
      %807 = vadd.xlane.f32.xlu0 %v806
      %v808 = vpop.xlane.xlu0 %807
      %v809 = vadd.f32 %v532, %v533
      %810 = vadd.xlane.f32.xlu0 %v809
      %v811 = vpop.xlane.xlu0 %810
      %v812 = vadd.f32 %v796, %v802
      %v813 = vadd.f32 %v797, %v805
      %v814 = vadd.f32 %v798, %v808
      %v815 = vadd.f32 %v799, %v811
      %vm816 = vcmask 7168
      %817 = vst.msk [vmem:[#allocation2] sm:$0xff] %vm816, %v812
      %818 = vst.msk [vmem:[#allocation2 + $0x8] sm:$0xff] %vm816, %v813
      %819 = vst.msk [vmem:[#allocation2 + $0x10] sm:$0xff] %vm816, %v814
      %820 = vst.msk [vmem:[#allocation2 + $0x18] sm:$0xff] %vm816, %v815
      %v821 = vld [vmem:[#allocation3] sm:$0xff]
      %v822 = vld [vmem:[#allocation3 + $0x8] sm:$0xff]
      %v823 = vld [vmem:[#allocation3 + $0x10] sm:$0xff]
      %v824 = vld [vmem:[#allocation3 + $0x18] sm:$0xff]
      %v825 = vld [vmem:[#allocation3 + $0x20] sm:$0xff]
      %v826 = vld [vmem:[#allocation3 + $0x28] sm:$0xff]
      %v827 = vld [vmem:[#allocation3 + $0x30] sm:$0xff]
      %v828 = vld [vmem:[#allocation3 + $0x38] sm:$0xff]
      %v829 = vadd.f32 %v724, %v725
      %830 = vadd.xlane.f32.xlu0 %v829
      %v831 = vpop.xlane.xlu0 %830
      %v832 = vadd.f32 %v726, %v727
      %833 = vadd.xlane.f32.xlu0 %v832
      %v834 = vpop.xlane.xlu0 %833
      %v835 = vadd.f32 %v728, %v729
      %836 = vadd.xlane.f32.xlu0 %v835
      %v837 = vpop.xlane.xlu0 %836
      %v838 = vadd.f32 %v730, %v731
      %839 = vadd.xlane.f32.xlu0 %v838
      %v840 = vpop.xlane.xlu0 %839
      %v841 = vadd.f32 %v732, %v733
      %842 = vadd.xlane.f32.xlu0 %v841
      %v843 = vpop.xlane.xlu0 %842
      %v844 = vadd.f32 %v734, %v735
      %845 = vadd.xlane.f32.xlu0 %v844
      %v846 = vpop.xlane.xlu0 %845
      %v847 = vadd.f32 %v736, %v737
      %848 = vadd.xlane.f32.xlu0 %v847
      %v849 = vpop.xlane.xlu0 %848
      %v850 = vadd.f32 %v738, %v739
      %851 = vadd.xlane.f32.xlu0 %v850
      %v852 = vpop.xlane.xlu0 %851
      %v853 = vadd.f32 %v821, %v831
      %v854 = vadd.f32 %v822, %v834
      %v855 = vadd.f32 %v823, %v837
      %v856 = vadd.f32 %v824, %v840
      %v857 = vadd.f32 %v825, %v843
      %v858 = vadd.f32 %v826, %v846
      %v859 = vadd.f32 %v827, %v849
      %v860 = vadd.f32 %v828, %v852
      %861 = vst.msk [vmem:[#allocation3] sm:$0xff] %vm816, %v853
      %862 = vst.msk [vmem:[#allocation3 + $0x8] sm:$0xff] %vm816, %v854
      %863 = vst.msk [vmem:[#allocation3 + $0x10] sm:$0xff] %vm816, %v855
      %864 = vst.msk [vmem:[#allocation3 + $0x18] sm:$0xff] %vm816, %v856
      %865 = vst.msk [vmem:[#allocation3 + $0x20] sm:$0xff] %vm816, %v857
      %866 = vst.msk [vmem:[#allocation3 + $0x28] sm:$0xff] %vm816, %v858
      %867 = vst.msk [vmem:[#allocation3 + $0x30] sm:$0xff] %vm816, %v859
      %868 = vst.msk [vmem:[#allocation3 + $0x38] sm:$0xff] %vm816, %v860
      // Predicated region
      $region45: #{_lambda_.2} parent=39 // pred_check
        %p869 = pneg %p394
      $region46: #{_lambda_.2} parent=39 // pred_check_branch
        %871 = sbr.rel (%p869) target = $region48
      $region47: #{_lambda_.2} parent=39 // pred_region
        %v872 = vld [vmem:[#allocation2] sm:$0xff]
        %v873 = vld [vmem:[#allocation2 + $0x8] sm:$0xff]
        %v874 = vld [vmem:[#allocation2 + $0x10] sm:$0xff]
        %v875 = vld [vmem:[#allocation2 + $0x18] sm:$0xff]
        %v876 = vmul.f32 %v872, 0.00390625
        %v877 = vmul.f32 %v873, 0.00390625
        %v878 = vmul.f32 %v874, 0.00390625
        %v879 = vmul.f32 %v875, 0.00390625
        %880 = vst.msk [vmem:[%s387] sm:$0xff] %vm816, %v876
        %881 = vst.msk [vmem:[%s387 + $0x8] sm:$0xff] %vm816, %v877
        %882 = vst.msk [vmem:[%s387 + $0x10] sm:$0xff] %vm816, %v878
        %883 = vst.msk [vmem:[%s387 + $0x18] sm:$0xff] %vm816, %v879
        %v884 = vld [vmem:[#allocation3] sm:$0xff]
        %v885 = vld [vmem:[#allocation3 + $0x8] sm:$0xff]
        %v886 = vld [vmem:[#allocation3 + $0x10] sm:$0xff]
        %v887 = vld [vmem:[#allocation3 + $0x18] sm:$0xff]
        %v888 = vld [vmem:[#allocation3 + $0x20] sm:$0xff]
        %v889 = vld [vmem:[#allocation3 + $0x28] sm:$0xff]
        %v890 = vld [vmem:[#allocation3 + $0x30] sm:$0xff]
        %v891 = vld [vmem:[#allocation3 + $0x38] sm:$0xff]
        %v892 = vmul.f32 %v884, 0.00390625
        %v893 = vmul.f32 %v885, 0.00390625
        %v894 = vmul.f32 %v886, 0.00390625
        %v895 = vmul.f32 %v887, 0.00390625
        %v896 = vmul.f32 %v888, 0.00390625
        %v897 = vmul.f32 %v889, 0.00390625
        %v898 = vmul.f32 %v890, 0.00390625
        %v899 = vmul.f32 %v891, 0.00390625
        %900 = vst.msk [vmem:[%s392] sm:$0xff] %vm816, %v892
        %901 = vst.msk [vmem:[%s392 + $0x8] sm:$0xff] %vm816, %v893
        %902 = vst.msk [vmem:[%s392 + $0x10] sm:$0xff] %vm816, %v894
        %903 = vst.msk [vmem:[%s392 + $0x18] sm:$0xff] %vm816, %v895
        %904 = vst.msk [vmem:[%s392 + $0x20] sm:$0xff] %vm816, %v896
        %905 = vst.msk [vmem:[%s392 + $0x28] sm:$0xff] %vm816, %v897
        %906 = vst.msk [vmem:[%s392 + $0x30] sm:$0xff] %vm816, %v898
        %907 = vst.msk [vmem:[%s392 + $0x38] sm:$0xff] %vm816, %v899
      $region48: #{_lambda_.2} parent=39 // pred_fallthru
        _
      %s908 = smul.u32 2, %s25
      %p909 = scmp.lt.s32.totalorder %s24, 9
      %s910 = scalar_select %p909, %s24, 9
      %p911 = scmp.lt.s32.totalorder %s908, 1
      %s912 = scalar_select %p911, %s908, 1
      %s913 = smul.addr %s910, 8
      %s914 = sadd.s32 %s912, %s913
      %s915 = smul.addr %s914, 4
      %s916 = scalar_lea.vmem %s5, %s915
      %s917 = smul.u32 2, %s25
      %p918 = scmp.lt.s32.totalorder %s24, 9
      %s919 = scalar_select %p918, %s24, 9
      %p920 = scmp.lt.s32.totalorder %s917, 1
      %s921 = scalar_select %p920, %s917, 1
      %s922 = smul.addr %s919, 16
      %s923 = sadd.s32 %s921, %s922
      %s924 = smul.addr %s923, 4
      %s925 = scalar_lea.vmem %s6, %s924
      %p926 = scmp.lt.s32.totalorder %s24, 9
      %s927 = scalar_select %p926, %s24, 9
      %s928 = smul.addr %s927, 4
      %s929 = smul.addr %s928, 8
      %s930 = scalar_lea.vmem %s7, %s929
      %p931 = scmp.lt.s32.totalorder %s24, 9
      %s932 = scalar_select %p931, %s24, 9
      %s933 = smul.addr %s932, 8
      %s934 = smul.addr %s933, 8
      %s935 = scalar_lea.vmem %s8, %s934
      // Predicated region
      $region49: #{_lambda_.2} parent=39 // pred_check
        %p936 = pneg %p164
      $region50: #{_lambda_.2} parent=39 // pred_check_branch
        %938 = sbr.rel (%p936) target = $region52
      $region51: #{_lambda_.2} parent=39 // pred_region
        %s939 = smul.u32 2, %s25
      $region52: #{_lambda_.2} parent=39 // pred_fallthru
        _
      // Predicated region
      $region53: #{_lambda_.2} parent=39 // pred_check
        %p940 = pneg %p192
      $region54: #{_lambda_.2} parent=39 // pred_check_branch
        %942 = sbr.rel (%p940) target = $region56
      $region55: #{_lambda_.2} parent=39 // pred_region
        %s943 = smul.u32 2, %s25
      $region56: #{_lambda_.2} parent=39 // pred_fallthru
        _
      // Predicated region
      $region57: #{_lambda_.2} parent=39 // pred_check
        %p944 = pneg %p218
      $region58: #{_lambda_.2} parent=39 // pred_check_branch
        %946 = sbr.rel (%p944) target = $region60
      $region59: #{_lambda_.2} parent=39 // pred_region
        _
      $region60: #{_lambda_.2} parent=39 // pred_fallthru
        _
      // Predicated region
      $region61: #{_lambda_.2} parent=39 // pred_check
        %p947 = pneg %p244
      $region62: #{_lambda_.2} parent=39 // pred_check_branch
        %949 = sbr.rel (%p947) target = $region64
      $region63: #{_lambda_.2} parent=39 // pred_region
        _
      $region64: #{_lambda_.2} parent=39 // pred_fallthru
        _
    $region40: #{_lambda_.2} parent=5 // pred_fallthru
      _
    %p950 = scmp.le.s32.totalorder 2, %s15
    // Predicated region
    $region65: #{_lambda_.2} parent=5 // pred_check
      %p951 = pneg %p950
    $region66: #{_lambda_.2} parent=5 // pred_check_branch
      %953 = sbr.rel (%p951) target = $region68
    $region67: #{_lambda_.2} parent=5 // pred_region
      %s954 = ssub.s32 %s15, 2
      // Predicated region
      $region69: #{_lambda_.2} parent=67 // pred_check
        %p955 = pneg %p170
      $region70: #{_lambda_.2} parent=67 // pred_check_branch
        %957 = sbr.rel (%p955) target = $region72
      $region71: #{_lambda_.2} parent=67 // pred_region
        %s958 = smul.u32 2, %s27
        %p959 = scmp.lt.s32.totalorder %s26, 9
        %s960 = scalar_select %p959, %s26, 9
        %p961 = scmp.lt.s32.totalorder %s958, 1
        %s962 = scalar_select %p961, %s958, 1
        %s963 = smul.addr %s960, 8
        %s964 = sadd.s32 %s962, %s963
        %s965 = smul.addr %s964, 4
        %s966 = scalar_lea.vmem %s5, %s965
      $region72: #{_lambda_.2} parent=67 // pred_fallthru
        _
      // Predicated region
      $region73: #{_lambda_.2} parent=67 // pred_check
        %p967 = pneg %p198
      $region74: #{_lambda_.2} parent=67 // pred_check_branch
        %969 = sbr.rel (%p967) target = $region76
      $region75: #{_lambda_.2} parent=67 // pred_region
        %s970 = smul.u32 2, %s27
        %p971 = scmp.lt.s32.totalorder %s26, 9
        %s972 = scalar_select %p971, %s26, 9
        %p973 = scmp.lt.s32.totalorder %s970, 1
        %s974 = scalar_select %p973, %s970, 1
        %s975 = smul.addr %s972, 16
        %s976 = sadd.s32 %s974, %s975
        %s977 = smul.addr %s976, 4
        %s978 = scalar_lea.vmem %s6, %s977
      $region76: #{_lambda_.2} parent=67 // pred_fallthru
        _
      // Predicated region
      $region77: #{_lambda_.2} parent=67 // pred_check
        %p979 = pneg %p224
      $region78: #{_lambda_.2} parent=67 // pred_check_branch
        %981 = sbr.rel (%p979) target = $region80
      $region79: #{_lambda_.2} parent=67 // pred_region
        %p982 = scmp.lt.s32.totalorder %s26, 9
        %s983 = scalar_select %p982, %s26, 9
        %s984 = smul.addr %s983, 4
        %s985 = smul.addr %s984, 8
        %s986 = scalar_lea.vmem %s7, %s985
      $region80: #{_lambda_.2} parent=67 // pred_fallthru
        _
      // Predicated region
      $region81: #{_lambda_.2} parent=67 // pred_check
        %p987 = pneg %p250
      $region82: #{_lambda_.2} parent=67 // pred_check_branch
        %989 = sbr.rel (%p987) target = $region84
      $region83: #{_lambda_.2} parent=67 // pred_region
        %p990 = scmp.lt.s32.totalorder %s26, 9
        %s991 = scalar_select %p990, %s26, 9
        %s992 = smul.addr %s991, 8
        %s993 = smul.addr %s992, 8
        %s994 = scalar_lea.vmem %s8, %s993
      $region84: #{_lambda_.2} parent=67 // pred_fallthru
        _
    $region68: #{_lambda_.2} parent=5 // pred_fallthru
      _
  $region6: #{_lambda_.2} parent=0 // loop_footer
    %s19 = sadd.s32 1, %s15
  $region7: #{_lambda_.2} parent=0 // loop_footer_branch
    %14 = sbr.rel target = $region3
  $region8: #{_lambda_.2} parent=0 // loop_exit
    _

// kernel: _lambda_.3
$region0: #{_lambda_.3}
  #allocation0 [shape = 'u32[]', space=smem, size = 0x4, offset = 0x4, fixed_abs, tag = 'smem constant byte address 0x4 - core index']
  #allocation1 [shape = 'u32[144,128]{1,0:T(1,128)}', space=vmem, size = 0x12000, scoped, tag = 'internal scratch']
  %s0 = inlined_call_operand.vmem [shape: f32[2,32], index: 0, kind: input, shape index: {}]
  %s1 = inlined_call_operand.vmem [shape: f32[8,32], index: 1, kind: input, shape index: {}]
  %s2 = inlined_call_operand.vmem [shape: f32[2,64], index: 2, kind: input, shape index: {}]
  %s3 = inlined_call_operand.vmem [shape: f32[8,64], index: 3, kind: input, shape index: {}]
  %s4 = inlined_call_operand.vmem [shape: f32[32,10], index: 4, kind: input, shape index: {}]
  %s5 = inlined_call_operand.vmem [shape: f32[1,10], index: 5, kind: input, shape index: {}]
  %s6 = inlined_call_operand.vmem [shape: f32[64,10], index: 6, kind: input, shape index: {}]
  %s7 = inlined_call_operand.vmem [shape: f32[1,10], index: 7, kind: input, shape index: {}]
  %s8 = inlined_call_operand.vmem [shape: f32[32,40], index: 8, kind: input, shape index: {}]
  %s9 = inlined_call_operand.vmem [shape: f32[1,40], index: 9, kind: input, shape index: {}]
  %s10 = inlined_call_operand.vmem [shape: f32[64,40], index: 10, kind: input, shape index: {}]
  %s11 = inlined_call_operand.vmem [shape: f32[1,40], index: 11, kind: input, shape index: {}]
  %s12 = inlined_call_operand.vmem [shape: s32[2,1], index: 12, kind: input, shape index: {}]
  %s13 = inlined_call_operand.vmem [shape: s32[8,1], index: 13, kind: input, shape index: {}]
  %s14 = inlined_call_operand.vmem [shape: f32[2,10], index: 14, kind: output, shape index: {0}]
  %s15 = inlined_call_operand.vmem [shape: f32[2,10], index: 15, kind: output, shape index: {1}]
  %s16 = inlined_call_operand.vmem [shape: f32[2,10], index: 16, kind: output, shape index: {2}]
  %s17 = inlined_call_operand.vmem [shape: f32[2,10], index: 17, kind: output, shape index: {3}]
  %s18 = inlined_call_operand.hbm [shape: f32[1,1], index: 18, kind: output, shape index: {4}]
  %19 = xla_tuple %s14, %s15, %s16, %s17, %s18
  %s20 = sld [smem:[#allocation0]]
  $region98: #{_lambda_.3} parent=0
    _
  %s22 = ssub.s32 1, %s20
  %s23 = scalar_select 0, %s22, %s20
  $region1: #{_lambda_.3} parent=0
    #allocation2 [shape = 'u8[512]{0}', space=vmem, size = 0x400, scoped, tag = 'output window, operand 4, single buffered']
    #allocation3 [shape = 's32[1]{0}', space=sflag, size = 0x4, scoped, tag = 'scoped memory for _lambda_.3']
    %24 = vsyncpa [#allocation3], 0
    // Predicated region
    $region2: #{_lambda_.3} parent=1 // pred_check
      _
    $region3: #{_lambda_.3} parent=1 // pred_check_branch
      %26 = sbr.rel (0) target = $region5
    $region4: #{_lambda_.3} parent=1 // pred_region
      _
    $region5: #{_lambda_.3} parent=1 // pred_fallthru
      _
    // Predicated region
    $region6: #{_lambda_.3} parent=1 // pred_check
      _
    $region7: #{_lambda_.3} parent=1 // pred_check_branch
      %28 = sbr.rel (0) target = $region9
    $region8: #{_lambda_.3} parent=1 // pred_region
      _
    $region9: #{_lambda_.3} parent=1 // pred_fallthru
      _
    // Predicated region
    $region10: #{_lambda_.3} parent=1 // pred_check
      _
    $region11: #{_lambda_.3} parent=1 // pred_check_branch
      %30 = sbr.rel (0) target = $region13
    $region12: #{_lambda_.3} parent=1 // pred_region
      _
    $region13: #{_lambda_.3} parent=1 // pred_fallthru
      _
    // Predicated region
    $region14: #{_lambda_.3} parent=1 // pred_check
      _
    $region15: #{_lambda_.3} parent=1 // pred_check_branch
      %32 = sbr.rel (0) target = $region17
    $region16: #{_lambda_.3} parent=1 // pred_region
      _
    $region17: #{_lambda_.3} parent=1 // pred_fallthru
      _
    // Predicated region
    $region18: #{_lambda_.3} parent=1 // pred_check
      _
    $region19: #{_lambda_.3} parent=1 // pred_check_branch
      %34 = sbr.rel (0) target = $region21
    $region20: #{_lambda_.3} parent=1 // pred_region
      _
    $region21: #{_lambda_.3} parent=1 // pred_fallthru
      _
    // Predicated region
    $region22: #{_lambda_.3} parent=1 // pred_check
      _
    $region23: #{_lambda_.3} parent=1 // pred_check_branch
      %36 = sbr.rel (0) target = $region25
    $region24: #{_lambda_.3} parent=1 // pred_region
      _
    $region25: #{_lambda_.3} parent=1 // pred_fallthru
      _
    // Predicated region
    $region26: #{_lambda_.3} parent=1 // pred_check
      _
    $region27: #{_lambda_.3} parent=1 // pred_check_branch
      %38 = sbr.rel (0) target = $region29
    $region28: #{_lambda_.3} parent=1 // pred_region
      _
    $region29: #{_lambda_.3} parent=1 // pred_fallthru
      _
    // Predicated region
    $region30: #{_lambda_.3} parent=1 // pred_check
      _
    $region31: #{_lambda_.3} parent=1 // pred_check_branch
      %40 = sbr.rel (0) target = $region33
    $region32: #{_lambda_.3} parent=1 // pred_region
      _
    $region33: #{_lambda_.3} parent=1 // pred_fallthru
      _
    // Predicated region
    $region34: #{_lambda_.3} parent=1 // pred_check
      _
    $region35: #{_lambda_.3} parent=1 // pred_check_branch
      %42 = sbr.rel (0) target = $region37
    $region36: #{_lambda_.3} parent=1 // pred_region
      _
    $region37: #{_lambda_.3} parent=1 // pred_fallthru
      _
    // Predicated region
    $region38: #{_lambda_.3} parent=1 // pred_check
      _
    $region39: #{_lambda_.3} parent=1 // pred_check_branch
      %44 = sbr.rel (0) target = $region41
    $region40: #{_lambda_.3} parent=1 // pred_region
      _
    $region41: #{_lambda_.3} parent=1 // pred_fallthru
      _
    // Predicated region
    $region42: #{_lambda_.3} parent=1 // pred_check
      _
    $region43: #{_lambda_.3} parent=1 // pred_check_branch
      %46 = sbr.rel (0) target = $region45
    $region44: #{_lambda_.3} parent=1 // pred_region
      _
    $region45: #{_lambda_.3} parent=1 // pred_fallthru
      _
    // Predicated region
    $region46: #{_lambda_.3} parent=1 // pred_check
      _
    $region47: #{_lambda_.3} parent=1 // pred_check_branch
      %48 = sbr.rel (0) target = $region49
    $region48: #{_lambda_.3} parent=1 // pred_region
      _
    $region49: #{_lambda_.3} parent=1 // pred_fallthru
      _
    // Predicated region
    $region50: #{_lambda_.3} parent=1 // pred_check
      _
    $region51: #{_lambda_.3} parent=1 // pred_check_branch
      %50 = sbr.rel (0) target = $region53
    $region52: #{_lambda_.3} parent=1 // pred_region
      _
    $region53: #{_lambda_.3} parent=1 // pred_fallthru
      _
    // Predicated region
    $region54: #{_lambda_.3} parent=1 // pred_check
      _
    $region55: #{_lambda_.3} parent=1 // pred_check_branch
      %52 = sbr.rel (0) target = $region57
    $region56: #{_lambda_.3} parent=1 // pred_region
      _
    $region57: #{_lambda_.3} parent=1 // pred_fallthru
      _
    %v53 = vld [vmem:[%s0] sm:$0x3]
    %v54 = vld [vmem:[%s4] sm:$0xff]
    %v55 = vld [vmem:[%s4 + $0x8] sm:$0xff]
    %v56 = vld [vmem:[%s4 + $0x10] sm:$0xff]
    %v57 = vld [vmem:[%s4 + $0x18] sm:$0xff]
    %v58 = vld [vmem:[%s5] sm:$0x1]
    %v60 = vlaneseq
    %v61 = vshrl.u32 %v60, 7
    %v62 = vsub.s32 0, %v61
    %v63 = vrot.slane %v58, %v62
    %vm65 = vcmask 261120
    %v67 = vsel %vm65, %v53, 0
    %69 = vmatprep.subr.mxu0 0.0
    %70 = vmatpush1.msra.mxu0 0.0
    %71 = vmatprep.subr.mxu0 0.0
    %72 = vmatpush1.msra.mxu0 0.0
    %73 = vmatprep.subr.mxu0 0.0
    %74 = vmatpush1.msra.mxu0 0.0
    %75 = vmatprep.subr.mxu0 0.0
    %76 = vmatpush1.msra.mxu0 0.0
    %77 = vmatprep.subr.mxu0 0.0
    %78 = vmatpush1.msra.mxu0 0.0
    %79 = vmatprep.subr.mxu0 0.0
    %80 = vmatpush1.msra.mxu0 0.0
    %81 = vmatprep.subr.mxu0 0.0
    %82 = vmatpush1.msra.mxu0 0.0
    %83 = vmatprep.subr.mxu0 0.0
    %84 = vmatpush1.msra.mxu0 0.0
    %85 = vmatprep.subr.mxu0 0.0
    %86 = vmatpush1.msra.mxu0 0.0
    %87 = vmatprep.subr.mxu0 0.0
    %88 = vmatpush1.msra.mxu0 0.0
    %89 = vmatprep.subr.mxu0 0.0
    %90 = vmatpush1.msra.mxu0 0.0
    %91 = vmatprep.subr.mxu0 0.0
    %92 = vmatpush1.msra.mxu0 0.0
    %93 = vmatprep.subr.mxu0 0.0
    %94 = vmatpush1.msra.mxu0 %v57
    %95 = vmatprep.subr.mxu0 0.0
    %96 = vmatpush1.msra.mxu0 %v56
    %97 = vmatprep.subr.mxu0 0.0
    %98 = vmatpush1.msra.mxu0 %v55
    %99 = vmatprep.subr.mxu0 0.0
    %100 = vmatpush1.msra.mxu0 %v54
    %101 = vmatprep.subr.mxu0 0.0
    %102 = vmatpush2.msra.mxu0 0.0
    %103 = vmatprep.subr.mxu0 0.0
    %104 = vmatpush2.msra.mxu0 0.0
    %105 = vmatprep.subr.mxu0 0.0
    %106 = vmatpush2.msra.mxu0 0.0
    %107 = vmatprep.subr.mxu0 0.0
    %108 = vmatpush2.msra.mxu0 0.0
    %109 = vmatprep.subr.mxu0 0.0
    %110 = vmatpush2.msra.mxu0 0.0
    %111 = vmatprep.subr.mxu0 0.0
    %112 = vmatpush2.msra.mxu0 0.0
    %113 = vmatprep.subr.mxu0 0.0
    %114 = vmatpush2.msra.mxu0 0.0
    %115 = vmatprep.subr.mxu0 0.0
    %116 = vmatpush2.msra.mxu0 0.0
    %117 = vmatprep.subr.mxu0 0.0
    %118 = vmatpush2.msra.mxu0 0.0
    %119 = vmatprep.subr.mxu0 0.0
    %120 = vmatpush2.msra.mxu0 0.0
    %121 = vmatprep.subr.mxu0 0.0
    %122 = vmatpush2.msra.mxu0 0.0
    %123 = vmatprep.subr.mxu0 0.0
    %124 = vmatpush2.msra.mxu0 0.0
    %125 = vmatprep.subr.mxu0 0.0
    %126 = vmatpush2.msra.mxu0 0.0
    %127 = vmatprep.subr.mxu0 0.0
    %128 = vmatpush2.msra.mxu0 0.0
    %129 = vmatprep.subr.mxu0 0.0
    %130 = vmatpush2.msra.mxu0 0.0
    %131 = vmatprep.subr.mxu0 0.0
    %132 = vmatpush2.msra.mxu0 0.0
    %133 = vmatprep.mubr.f32.mxu0 0.0
    %134 = vmatmul.mubr.f32.gmra.mxu0 %v67
    %v135 = vpop.f32.mrf.mxu0
    %v136 = vadd.f32 %v63, %v135
    %v137 = vpop.f32.mrf.mxu0
    %138 = vdwg.mxu0
    %v139 = vld [vmem:[%s2] sm:$0x3]
    %v140 = vld [vmem:[%s6] sm:$0xff]
    %v141 = vld [vmem:[%s6 + $0x8] sm:$0xff]
    %v142 = vld [vmem:[%s6 + $0x10] sm:$0xff]
    %v143 = vld [vmem:[%s6 + $0x18] sm:$0xff]
    %v144 = vld [vmem:[%s6 + $0x20] sm:$0xff]
    %v145 = vld [vmem:[%s6 + $0x28] sm:$0xff]
    %v146 = vld [vmem:[%s6 + $0x30] sm:$0xff]
    %v147 = vld [vmem:[%s6 + $0x38] sm:$0xff]
    %v148 = vld [vmem:[%s7] sm:$0x1]
    %v150 = vlaneseq
    %v151 = vshrl.u32 %v150, 7
    %v152 = vsub.s32 0, %v151
    %v153 = vrot.slane %v148, %v152
    %vm155 = vcmask 523264
    %v157 = vsel %vm155, %v139, 0
    %159 = vmatprep.subr.mxu0 0.0
    %160 = vmatpush1.msra.mxu0 0.0
    %161 = vmatprep.subr.mxu0 0.0
    %162 = vmatpush1.msra.mxu0 0.0
    %163 = vmatprep.subr.mxu0 0.0
    %164 = vmatpush1.msra.mxu0 0.0
    %165 = vmatprep.subr.mxu0 0.0
    %166 = vmatpush1.msra.mxu0 0.0
    %167 = vmatprep.subr.mxu0 0.0
    %168 = vmatpush1.msra.mxu0 0.0
    %169 = vmatprep.subr.mxu0 0.0
    %170 = vmatpush1.msra.mxu0 0.0
    %171 = vmatprep.subr.mxu0 0.0
    %172 = vmatpush1.msra.mxu0 0.0
    %173 = vmatprep.subr.mxu0 0.0
    %174 = vmatpush1.msra.mxu0 0.0
    %175 = vmatprep.subr.mxu0 0.0
    %176 = vmatpush1.msra.mxu0 %v147
    %177 = vmatprep.subr.mxu0 0.0
    %178 = vmatpush1.msra.mxu0 %v146
    %179 = vmatprep.subr.mxu0 0.0
    %180 = vmatpush1.msra.mxu0 %v145
    %181 = vmatprep.subr.mxu0 0.0
    %182 = vmatpush1.msra.mxu0 %v144
    %183 = vmatprep.subr.mxu0 0.0
    %184 = vmatpush1.msra.mxu0 %v143
    %185 = vmatprep.subr.mxu0 0.0
    %186 = vmatpush1.msra.mxu0 %v142
    %187 = vmatprep.subr.mxu0 0.0
    %188 = vmatpush1.msra.mxu0 %v141
    %189 = vmatprep.subr.mxu0 0.0
    %190 = vmatpush1.msra.mxu0 %v140
    %191 = vmatprep.subr.mxu0 0.0
    %192 = vmatpush2.msra.mxu0 0.0
    %193 = vmatprep.subr.mxu0 0.0
    %194 = vmatpush2.msra.mxu0 0.0
    %195 = vmatprep.subr.mxu0 0.0
    %196 = vmatpush2.msra.mxu0 0.0
    %197 = vmatprep.subr.mxu0 0.0
    %198 = vmatpush2.msra.mxu0 0.0
    %199 = vmatprep.subr.mxu0 0.0
    %200 = vmatpush2.msra.mxu0 0.0
    %201 = vmatprep.subr.mxu0 0.0
    %202 = vmatpush2.msra.mxu0 0.0
    %203 = vmatprep.subr.mxu0 0.0
    %204 = vmatpush2.msra.mxu0 0.0
    %205 = vmatprep.subr.mxu0 0.0
    %206 = vmatpush2.msra.mxu0 0.0
    %207 = vmatprep.subr.mxu0 0.0
    %208 = vmatpush2.msra.mxu0 0.0
    %209 = vmatprep.subr.mxu0 0.0
    %210 = vmatpush2.msra.mxu0 0.0
    %211 = vmatprep.subr.mxu0 0.0
    %212 = vmatpush2.msra.mxu0 0.0
    %213 = vmatprep.subr.mxu0 0.0
    %214 = vmatpush2.msra.mxu0 0.0
    %215 = vmatprep.subr.mxu0 0.0
    %216 = vmatpush2.msra.mxu0 0.0
    %217 = vmatprep.subr.mxu0 0.0
    %218 = vmatpush2.msra.mxu0 0.0
    %219 = vmatprep.subr.mxu0 0.0
    %220 = vmatpush2.msra.mxu0 0.0
    %221 = vmatprep.subr.mxu0 0.0
    %222 = vmatpush2.msra.mxu0 0.0
    %223 = vmatprep.mubr.f32.mxu0 0.0
    %224 = vmatmul.mubr.f32.gmra.mxu0 %v157
    %v225 = vpop.f32.mrf.mxu0
    %v226 = vadd.f32 %v153, %v225
    %v227 = vpop.f32.mrf.mxu0
    %228 = vdwg.mxu0
    %v229 = vld [vmem:[%s1] sm:$0xff]
    %v230 = vld [vmem:[%s8] sm:$0xff]
    %v231 = vld [vmem:[%s8 + $0x8] sm:$0xff]
    %v232 = vld [vmem:[%s8 + $0x10] sm:$0xff]
    %v233 = vld [vmem:[%s8 + $0x18] sm:$0xff]
    %v234 = vld [vmem:[%s9] sm:$0x1]
    %v236 = vlaneseq
    %v237 = vshrl.u32 %v236, 7
    %v238 = vsub.s32 0, %v237
    %v239 = vrot.slane %v234, %v238
    %v242 = vsel %vm65, %v229, 0
    %244 = vmatprep.subr.mxu0 0.0
    %245 = vmatpush1.msra.mxu0 0.0
    %246 = vmatprep.subr.mxu0 0.0
    %247 = vmatpush1.msra.mxu0 0.0
    %248 = vmatprep.subr.mxu0 0.0
    %249 = vmatpush1.msra.mxu0 0.0
    %250 = vmatprep.subr.mxu0 0.0
    %251 = vmatpush1.msra.mxu0 0.0
    %252 = vmatprep.subr.mxu0 0.0
    %253 = vmatpush1.msra.mxu0 0.0
    %254 = vmatprep.subr.mxu0 0.0
    %255 = vmatpush1.msra.mxu0 0.0
    %256 = vmatprep.subr.mxu0 0.0
    %257 = vmatpush1.msra.mxu0 0.0
    %258 = vmatprep.subr.mxu0 0.0
    %259 = vmatpush1.msra.mxu0 0.0
    %260 = vmatprep.subr.mxu0 0.0
    %261 = vmatpush1.msra.mxu0 0.0
    %262 = vmatprep.subr.mxu0 0.0
    %263 = vmatpush1.msra.mxu0 0.0
    %264 = vmatprep.subr.mxu0 0.0
    %265 = vmatpush1.msra.mxu0 0.0
    %266 = vmatprep.subr.mxu0 0.0
    %267 = vmatpush1.msra.mxu0 0.0
    %268 = vmatprep.subr.mxu0 0.0
    %269 = vmatpush1.msra.mxu0 %v233
    %270 = vmatprep.subr.mxu0 0.0
    %271 = vmatpush1.msra.mxu0 %v232
    %272 = vmatprep.subr.mxu0 0.0
    %273 = vmatpush1.msra.mxu0 %v231
    %274 = vmatprep.subr.mxu0 0.0
    %275 = vmatpush1.msra.mxu0 %v230
    %276 = vmatprep.subr.mxu0 0.0
    %277 = vmatpush2.msra.mxu0 0.0
    %278 = vmatprep.subr.mxu0 0.0
    %279 = vmatpush2.msra.mxu0 0.0
    %280 = vmatprep.subr.mxu0 0.0
    %281 = vmatpush2.msra.mxu0 0.0
    %282 = vmatprep.subr.mxu0 0.0
    %283 = vmatpush2.msra.mxu0 0.0
    %284 = vmatprep.subr.mxu0 0.0
    %285 = vmatpush2.msra.mxu0 0.0
    %286 = vmatprep.subr.mxu0 0.0
    %287 = vmatpush2.msra.mxu0 0.0
    %288 = vmatprep.subr.mxu0 0.0
    %289 = vmatpush2.msra.mxu0 0.0
    %290 = vmatprep.subr.mxu0 0.0
    %291 = vmatpush2.msra.mxu0 0.0
    %292 = vmatprep.subr.mxu0 0.0
    %293 = vmatpush2.msra.mxu0 0.0
    %294 = vmatprep.subr.mxu0 0.0
    %295 = vmatpush2.msra.mxu0 0.0
    %296 = vmatprep.subr.mxu0 0.0
    %297 = vmatpush2.msra.mxu0 0.0
    %298 = vmatprep.subr.mxu0 0.0
    %299 = vmatpush2.msra.mxu0 0.0
    %300 = vmatprep.subr.mxu0 0.0
    %301 = vmatpush2.msra.mxu0 0.0
    %302 = vmatprep.subr.mxu0 0.0
    %303 = vmatpush2.msra.mxu0 0.0
    %304 = vmatprep.subr.mxu0 0.0
    %305 = vmatpush2.msra.mxu0 0.0
    %306 = vmatprep.subr.mxu0 0.0
    %307 = vmatpush2.msra.mxu0 0.0
    %308 = vmatprep.mubr.f32.mxu0 0.0
    %309 = vmatmul.mubr.f32.gmra.mxu0 %v242
    %v310 = vpop.f32.mrf.mxu0
    %v311 = vadd.f32 %v239, %v310
    %v312 = vpop.f32.mrf.mxu0
    %313 = vdwg.mxu0
    %v314 = vld [vmem:[%s3] sm:$0xff]
    %v315 = vld [vmem:[%s10] sm:$0xff]
    %v316 = vld [vmem:[%s10 + $0x8] sm:$0xff]
    %v317 = vld [vmem:[%s10 + $0x10] sm:$0xff]
    %v318 = vld [vmem:[%s10 + $0x18] sm:$0xff]
    %v319 = vld [vmem:[%s10 + $0x20] sm:$0xff]
    %v320 = vld [vmem:[%s10 + $0x28] sm:$0xff]
    %v321 = vld [vmem:[%s10 + $0x30] sm:$0xff]
    %v322 = vld [vmem:[%s10 + $0x38] sm:$0xff]
    %v323 = vld [vmem:[%s11] sm:$0x1]
    %v325 = vlaneseq
    %v326 = vshrl.u32 %v325, 7
    %v327 = vsub.s32 0, %v326
    %v328 = vrot.slane %v323, %v327
    %v331 = vsel %vm155, %v314, 0
    %333 = vmatprep.subr.mxu0 0.0
    %334 = vmatpush1.msra.mxu0 0.0
    %335 = vmatprep.subr.mxu0 0.0
    %336 = vmatpush1.msra.mxu0 0.0
    %337 = vmatprep.subr.mxu0 0.0
    %338 = vmatpush1.msra.mxu0 0.0
    %339 = vmatprep.subr.mxu0 0.0
    %340 = vmatpush1.msra.mxu0 0.0
    %341 = vmatprep.subr.mxu0 0.0
    %342 = vmatpush1.msra.mxu0 0.0
    %343 = vmatprep.subr.mxu0 0.0
    %344 = vmatpush1.msra.mxu0 0.0
    %345 = vmatprep.subr.mxu0 0.0
    %346 = vmatpush1.msra.mxu0 0.0
    %347 = vmatprep.subr.mxu0 0.0
    %348 = vmatpush1.msra.mxu0 0.0
    %349 = vmatprep.subr.mxu0 0.0
    %350 = vmatpush1.msra.mxu0 %v322
    %351 = vmatprep.subr.mxu0 0.0
    %352 = vmatpush1.msra.mxu0 %v321
    %353 = vmatprep.subr.mxu0 0.0
    %354 = vmatpush1.msra.mxu0 %v320
    %355 = vmatprep.subr.mxu0 0.0
    %356 = vmatpush1.msra.mxu0 %v319
    %357 = vmatprep.subr.mxu0 0.0
    %358 = vmatpush1.msra.mxu0 %v318
    %359 = vmatprep.subr.mxu0 0.0
    %360 = vmatpush1.msra.mxu0 %v317
    %361 = vmatprep.subr.mxu0 0.0
    %362 = vmatpush1.msra.mxu0 %v316
    %363 = vmatprep.subr.mxu0 0.0
    %364 = vmatpush1.msra.mxu0 %v315
    %365 = vmatprep.subr.mxu0 0.0
    %366 = vmatpush2.msra.mxu0 0.0
    %367 = vmatprep.subr.mxu0 0.0
    %368 = vmatpush2.msra.mxu0 0.0
    %369 = vmatprep.subr.mxu0 0.0
    %370 = vmatpush2.msra.mxu0 0.0
    %371 = vmatprep.subr.mxu0 0.0
    %372 = vmatpush2.msra.mxu0 0.0
    %373 = vmatprep.subr.mxu0 0.0
    %374 = vmatpush2.msra.mxu0 0.0
    %375 = vmatprep.subr.mxu0 0.0
    %376 = vmatpush2.msra.mxu0 0.0
    %377 = vmatprep.subr.mxu0 0.0
    %378 = vmatpush2.msra.mxu0 0.0
    %379 = vmatprep.subr.mxu0 0.0
    %380 = vmatpush2.msra.mxu0 0.0
    %381 = vmatprep.subr.mxu0 0.0
    %382 = vmatpush2.msra.mxu0 0.0
    %383 = vmatprep.subr.mxu0 0.0
    %384 = vmatpush2.msra.mxu0 0.0
    %385 = vmatprep.subr.mxu0 0.0
    %386 = vmatpush2.msra.mxu0 0.0
    %387 = vmatprep.subr.mxu0 0.0
    %388 = vmatpush2.msra.mxu0 0.0
    %389 = vmatprep.subr.mxu0 0.0
    %390 = vmatpush2.msra.mxu0 0.0
    %391 = vmatprep.subr.mxu0 0.0
    %392 = vmatpush2.msra.mxu0 0.0
    %393 = vmatprep.subr.mxu0 0.0
    %394 = vmatpush2.msra.mxu0 0.0
    %395 = vmatprep.subr.mxu0 0.0
    %396 = vmatpush2.msra.mxu0 0.0
    %397 = vmatprep.mubr.f32.mxu0 0.0
    %398 = vmatmul.mubr.f32.gmra.mxu0 %v331
    %v399 = vpop.f32.mrf.mxu0
    %v400 = vadd.f32 %v328, %v399
    %v401 = vpop.f32.mrf.mxu0
    %402 = vdwg.mxu0
    %v403 = vlaneseq
    %v404 = vshrl.u32 %v403, 7
    %v405 = vlaneseq
    %v406 = vand.u32 %v405, 127
    %v407 = vand.u32 %v404, 3
    %v408 = vand.u32 %v406, 3
    %vm409 = vcmp.eq.s32.totalorder %v407, %v408
    %v410 = vsel %vm409, %v311, 0.0
    %v411 = vshra.s32 %v406, 2
    %vm412 = vcmp.eq.s32.totalorder %v411, %v404
    %v413 = vsel %vm412, 1, 0
    %v414 = vcvt.s32.f32 %v413
    %v415 = vadd.s32 %v404, 8
    %v416 = vadd.s32 %v404, 16
    %v417 = vadd.s32 %v404, 24
    %v418 = vadd.s32 %v404, 32
    %v419 = vshra.s32 %v404, 2
    %v420 = vshra.s32 %v415, 2
    %v421 = vshra.s32 %v416, 2
    %v422 = vshra.s32 %v417, 2
    %v423 = vshra.s32 %v418, 2
    %vm424 = vcmp.eq.s32.totalorder %v419, %v406
    %vm425 = vcmp.eq.s32.totalorder %v420, %v406
    %vm426 = vcmp.eq.s32.totalorder %v421, %v406
    %vm427 = vcmp.eq.s32.totalorder %v422, %v406
    %vm428 = vcmp.eq.s32.totalorder %v423, %v406
    %v429 = vsel %vm424, 1, 0
    %v430 = vsel %vm425, 1, 0
    %v431 = vsel %vm426, 1, 0
    %v432 = vsel %vm427, 1, 0
    %v433 = vsel %vm428, 1, 0
    %v434 = vcvt.s32.f32 %v429
    %v435 = vcvt.s32.f32 %v430
    %v436 = vcvt.s32.f32 %v431
    %v437 = vcvt.s32.f32 %v432
    %v438 = vcvt.s32.f32 %v433
    %vm439 = vcmask 64512
    %v441 = vsel %vm439, %v414, 0
    %443 = vmatprep.subr.mxu0 0.0
    %444 = vmatpush1.msra.mxu0 0.0
    %445 = vmatprep.subr.mxu0 0.0
    %446 = vmatpush1.msra.mxu0 0.0
    %447 = vmatprep.subr.mxu0 0.0
    %448 = vmatpush1.msra.mxu0 0.0
    %449 = vmatprep.subr.mxu0 0.0
    %450 = vmatpush1.msra.mxu0 0.0
    %451 = vmatprep.subr.mxu0 0.0
    %452 = vmatpush1.msra.mxu0 0.0
    %453 = vmatprep.subr.mxu0 0.0
    %454 = vmatpush1.msra.mxu0 0.0
    %455 = vmatprep.subr.mxu0 0.0
    %456 = vmatpush1.msra.mxu0 0.0
    %457 = vmatprep.subr.mxu0 0.0
    %458 = vmatpush1.msra.mxu0 0.0
    %459 = vmatprep.subr.mxu0 0.0
    %460 = vmatpush1.msra.mxu0 0.0
    %461 = vmatprep.subr.mxu0 0.0
    %462 = vmatpush1.msra.mxu0 0.0
    %463 = vmatprep.subr.mxu0 0.0
    %464 = vmatpush1.msra.mxu0 0.0
    %465 = vmatprep.subr.mxu0 0.0
    %466 = vmatpush1.msra.mxu0 0.0
    %467 = vmatprep.subr.mxu0 0.0
    %468 = vmatpush1.msra.mxu0 0.0
    %469 = vmatprep.subr.mxu0 0.0
    %470 = vmatpush1.msra.mxu0 0.0
    %471 = vmatprep.subr.mxu0 0.0
    %472 = vmatpush1.msra.mxu0 0.0
    %473 = vmatprep.subr.mxu0 0.0
    %474 = vmatpush1.msra.mxu0 %v410
    %475 = vmatprep.subr.mxu0 0.0
    %476 = vmatpush2.msra.mxu0 0.0
    %477 = vmatprep.subr.mxu0 0.0
    %478 = vmatpush2.msra.mxu0 0.0
    %479 = vmatprep.subr.mxu0 0.0
    %480 = vmatpush2.msra.mxu0 0.0
    %481 = vmatprep.subr.mxu0 0.0
    %482 = vmatpush2.msra.mxu0 0.0
    %483 = vmatprep.subr.mxu0 0.0
    %484 = vmatpush2.msra.mxu0 0.0
    %485 = vmatprep.subr.mxu0 0.0
    %486 = vmatpush2.msra.mxu0 0.0
    %487 = vmatprep.subr.mxu0 0.0
    %488 = vmatpush2.msra.mxu0 0.0
    %489 = vmatprep.subr.mxu0 0.0
    %490 = vmatpush2.msra.mxu0 0.0
    %491 = vmatprep.subr.mxu0 0.0
    %492 = vmatpush2.msra.mxu0 0.0
    %493 = vmatprep.subr.mxu0 0.0
    %494 = vmatpush2.msra.mxu0 0.0
    %495 = vmatprep.subr.mxu0 0.0
    %496 = vmatpush2.msra.mxu0 0.0
    %497 = vmatprep.subr.mxu0 0.0
    %498 = vmatpush2.msra.mxu0 0.0
    %499 = vmatprep.subr.mxu0 0.0
    %500 = vmatpush2.msra.mxu0 0.0
    %501 = vmatprep.subr.mxu0 0.0
    %502 = vmatpush2.msra.mxu0 0.0
    %503 = vmatprep.subr.mxu0 0.0
    %504 = vmatpush2.msra.mxu0 0.0
    %505 = vmatprep.subr.mxu0 0.0
    %506 = vmatpush2.msra.mxu0 0.0
    %507 = vmatprep.mubr.f32.mxu0 0.0
    %508 = vmatmul.mubr.f32.gmra.mxu0 %v441
    %v509 = vpop.f32.mrf.mxu0
    %v510 = vadd.f32 0.0, %v509
    %v511 = vpop.f32.mrf.mxu0
    %512 = vdwg.mxu0
    %vm513 = vcmask 326656
    %v515 = vsel %vm513, %v510, 0
    %517 = vmatprep.subr.mxu0 0.0
    %518 = vmatpush1.msra.mxu0 0.0
    %519 = vmatprep.subr.mxu0 0.0
    %520 = vmatpush1.msra.mxu0 0.0
    %521 = vmatprep.subr.mxu0 0.0
    %522 = vmatpush1.msra.mxu0 0.0
    %523 = vmatprep.subr.mxu0 0.0
    %524 = vmatpush1.msra.mxu0 0.0
    %525 = vmatprep.subr.mxu0 0.0
    %526 = vmatpush1.msra.mxu0 0.0
    %527 = vmatprep.subr.mxu0 0.0
    %528 = vmatpush1.msra.mxu0 0.0
    %529 = vmatprep.subr.mxu0 0.0
    %530 = vmatpush1.msra.mxu0 0.0
    %531 = vmatprep.subr.mxu0 0.0
    %532 = vmatpush1.msra.mxu0 0.0
    %533 = vmatprep.subr.mxu0 0.0
    %534 = vmatpush1.msra.mxu0 0.0
    %535 = vmatprep.subr.mxu0 0.0
    %536 = vmatpush1.msra.mxu0 0.0
    %537 = vmatprep.subr.mxu0 0.0
    %538 = vmatpush1.msra.mxu0 0.0
    %539 = vmatprep.subr.mxu0 0.0
    %540 = vmatpush1.msra.mxu0 %v438
    %541 = vmatprep.subr.mxu0 0.0
    %542 = vmatpush1.msra.mxu0 %v437
    %543 = vmatprep.subr.mxu0 0.0
    %544 = vmatpush1.msra.mxu0 %v436
    %545 = vmatprep.subr.mxu0 0.0
    %546 = vmatpush1.msra.mxu0 %v435
    %547 = vmatprep.subr.mxu0 0.0
    %548 = vmatpush1.msra.mxu0 %v434
    %549 = vmatprep.subr.mxu0 0.0
    %550 = vmatpush2.msra.mxu0 0.0
    %551 = vmatprep.subr.mxu0 0.0
    %552 = vmatpush2.msra.mxu0 0.0
    %553 = vmatprep.subr.mxu0 0.0
    %554 = vmatpush2.msra.mxu0 0.0
    %555 = vmatprep.subr.mxu0 0.0
    %556 = vmatpush2.msra.mxu0 0.0
    %557 = vmatprep.subr.mxu0 0.0
    %558 = vmatpush2.msra.mxu0 0.0
    %559 = vmatprep.subr.mxu0 0.0
    %560 = vmatpush2.msra.mxu0 0.0
    %561 = vmatprep.subr.mxu0 0.0
    %562 = vmatpush2.msra.mxu0 0.0
    %563 = vmatprep.subr.mxu0 0.0
    %564 = vmatpush2.msra.mxu0 0.0
    %565 = vmatprep.subr.mxu0 0.0
    %566 = vmatpush2.msra.mxu0 0.0
    %567 = vmatprep.subr.mxu0 0.0
    %568 = vmatpush2.msra.mxu0 0.0
    %569 = vmatprep.subr.mxu0 0.0
    %570 = vmatpush2.msra.mxu0 0.0
    %571 = vmatprep.subr.mxu0 0.0
    %572 = vmatpush2.msra.mxu0 0.0
    %573 = vmatprep.subr.mxu0 0.0
    %574 = vmatpush2.msra.mxu0 0.0
    %575 = vmatprep.subr.mxu0 0.0
    %576 = vmatpush2.msra.mxu0 0.0
    %577 = vmatprep.subr.mxu0 0.0
    %578 = vmatpush2.msra.mxu0 0.0
    %579 = vmatprep.subr.mxu0 0.0
    %580 = vmatpush2.msra.mxu0 0.0
    %581 = vmatprep.mubr.f32.mxu0 0.0
    %582 = vmatmul.mubr.f32.gmra.mxu0 %v515
    %v583 = vpop.f32.mrf.mxu0
    %v584 = vadd.f32 0.0, %v583
    %v585 = vpop.f32.mrf.mxu0
    %586 = vdwg.mxu0
    %v587 = vmul.f32 %v584, 0.25
    %v588 = vsel %vm409, %v400, 0.0
    %589 = vmatprep.subr.mxu0 0.0
    %590 = vmatpush1.msra.mxu0 0.0
    %591 = vmatprep.subr.mxu0 0.0
    %592 = vmatpush1.msra.mxu0 0.0
    %593 = vmatprep.subr.mxu0 0.0
    %594 = vmatpush1.msra.mxu0 0.0
    %595 = vmatprep.subr.mxu0 0.0
    %596 = vmatpush1.msra.mxu0 0.0
    %597 = vmatprep.subr.mxu0 0.0
    %598 = vmatpush1.msra.mxu0 0.0
    %599 = vmatprep.subr.mxu0 0.0
    %600 = vmatpush1.msra.mxu0 0.0
    %601 = vmatprep.subr.mxu0 0.0
    %602 = vmatpush1.msra.mxu0 0.0
    %603 = vmatprep.subr.mxu0 0.0
    %604 = vmatpush1.msra.mxu0 0.0
    %605 = vmatprep.subr.mxu0 0.0
    %606 = vmatpush1.msra.mxu0 0.0
    %607 = vmatprep.subr.mxu0 0.0
    %608 = vmatpush1.msra.mxu0 0.0
    %609 = vmatprep.subr.mxu0 0.0
    %610 = vmatpush1.msra.mxu0 0.0
    %611 = vmatprep.subr.mxu0 0.0
    %612 = vmatpush1.msra.mxu0 0.0
    %613 = vmatprep.subr.mxu0 0.0
    %614 = vmatpush1.msra.mxu0 0.0
    %615 = vmatprep.subr.mxu0 0.0
    %616 = vmatpush1.msra.mxu0 0.0
    %617 = vmatprep.subr.mxu0 0.0
    %618 = vmatpush1.msra.mxu0 0.0
    %619 = vmatprep.subr.mxu0 0.0
    %620 = vmatpush1.msra.mxu0 %v588
    %621 = vmatprep.subr.mxu0 0.0
    %622 = vmatpush2.msra.mxu0 0.0
    %623 = vmatprep.subr.mxu0 0.0
    %624 = vmatpush2.msra.mxu0 0.0
    %625 = vmatprep.subr.mxu0 0.0
    %626 = vmatpush2.msra.mxu0 0.0
    %627 = vmatprep.subr.mxu0 0.0
    %628 = vmatpush2.msra.mxu0 0.0
    %629 = vmatprep.subr.mxu0 0.0
    %630 = vmatpush2.msra.mxu0 0.0
    %631 = vmatprep.subr.mxu0 0.0
    %632 = vmatpush2.msra.mxu0 0.0
    %633 = vmatprep.subr.mxu0 0.0
    %634 = vmatpush2.msra.mxu0 0.0
    %635 = vmatprep.subr.mxu0 0.0
    %636 = vmatpush2.msra.mxu0 0.0
    %637 = vmatprep.subr.mxu0 0.0
    %638 = vmatpush2.msra.mxu0 0.0
    %639 = vmatprep.subr.mxu0 0.0
    %640 = vmatpush2.msra.mxu0 0.0
    %641 = vmatprep.subr.mxu0 0.0
    %642 = vmatpush2.msra.mxu0 0.0
    %643 = vmatprep.subr.mxu0 0.0
    %644 = vmatpush2.msra.mxu0 0.0
    %645 = vmatprep.subr.mxu0 0.0
    %646 = vmatpush2.msra.mxu0 0.0
    %647 = vmatprep.subr.mxu0 0.0
    %648 = vmatpush2.msra.mxu0 0.0
    %649 = vmatprep.subr.mxu0 0.0
    %650 = vmatpush2.msra.mxu0 0.0
    %651 = vmatprep.subr.mxu0 0.0
    %652 = vmatpush2.msra.mxu0 0.0
    %653 = vmatprep.mubr.f32.mxu0 0.0
    %654 = vmatmul.mubr.f32.gmra.mxu0 %v441
    %v655 = vpop.f32.mrf.mxu0
    %v656 = vadd.f32 0.0, %v655
    %v657 = vpop.f32.mrf.mxu0
    %658 = vdwg.mxu0
    %v660 = vsel %vm513, %v656, 0
    %662 = vmatprep.subr.mxu0 0.0
    %663 = vmatpush1.msra.mxu0 0.0
    %664 = vmatprep.subr.mxu0 0.0
    %665 = vmatpush1.msra.mxu0 0.0
    %666 = vmatprep.subr.mxu0 0.0
    %667 = vmatpush1.msra.mxu0 0.0
    %668 = vmatprep.subr.mxu0 0.0
    %669 = vmatpush1.msra.mxu0 0.0
    %670 = vmatprep.subr.mxu0 0.0
    %671 = vmatpush1.msra.mxu0 0.0
    %672 = vmatprep.subr.mxu0 0.0
    %673 = vmatpush1.msra.mxu0 0.0
    %674 = vmatprep.subr.mxu0 0.0
    %675 = vmatpush1.msra.mxu0 0.0
    %676 = vmatprep.subr.mxu0 0.0
    %677 = vmatpush1.msra.mxu0 0.0
    %678 = vmatprep.subr.mxu0 0.0
    %679 = vmatpush1.msra.mxu0 0.0
    %680 = vmatprep.subr.mxu0 0.0
    %681 = vmatpush1.msra.mxu0 0.0
    %682 = vmatprep.subr.mxu0 0.0
    %683 = vmatpush1.msra.mxu0 0.0
    %684 = vmatprep.subr.mxu0 0.0
    %685 = vmatpush1.msra.mxu0 %v438
    %686 = vmatprep.subr.mxu0 0.0
    %687 = vmatpush1.msra.mxu0 %v437
    %688 = vmatprep.subr.mxu0 0.0
    %689 = vmatpush1.msra.mxu0 %v436
    %690 = vmatprep.subr.mxu0 0.0
    %691 = vmatpush1.msra.mxu0 %v435
    %692 = vmatprep.subr.mxu0 0.0
    %693 = vmatpush1.msra.mxu0 %v434
    %694 = vmatprep.subr.mxu0 0.0
    %695 = vmatpush2.msra.mxu0 0.0
    %696 = vmatprep.subr.mxu0 0.0
    %697 = vmatpush2.msra.mxu0 0.0
    %698 = vmatprep.subr.mxu0 0.0
    %699 = vmatpush2.msra.mxu0 0.0
    %700 = vmatprep.subr.mxu0 0.0
    %701 = vmatpush2.msra.mxu0 0.0
    %702 = vmatprep.subr.mxu0 0.0
    %703 = vmatpush2.msra.mxu0 0.0
    %704 = vmatprep.subr.mxu0 0.0
    %705 = vmatpush2.msra.mxu0 0.0
    %706 = vmatprep.subr.mxu0 0.0
    %707 = vmatpush2.msra.mxu0 0.0
    %708 = vmatprep.subr.mxu0 0.0
    %709 = vmatpush2.msra.mxu0 0.0
    %710 = vmatprep.subr.mxu0 0.0
    %711 = vmatpush2.msra.mxu0 0.0
    %712 = vmatprep.subr.mxu0 0.0
    %713 = vmatpush2.msra.mxu0 0.0
    %714 = vmatprep.subr.mxu0 0.0
    %715 = vmatpush2.msra.mxu0 0.0
    %716 = vmatprep.subr.mxu0 0.0
    %717 = vmatpush2.msra.mxu0 0.0
    %718 = vmatprep.subr.mxu0 0.0
    %719 = vmatpush2.msra.mxu0 0.0
    %720 = vmatprep.subr.mxu0 0.0
    %721 = vmatpush2.msra.mxu0 0.0
    %722 = vmatprep.subr.mxu0 0.0
    %723 = vmatpush2.msra.mxu0 0.0
    %724 = vmatprep.subr.mxu0 0.0
    %725 = vmatpush2.msra.mxu0 0.0
    %726 = vmatprep.mubr.f32.mxu0 0.0
    %727 = vmatmul.mubr.f32.gmra.mxu0 %v660
    %v728 = vpop.f32.mrf.mxu0
    %v729 = vadd.f32 0.0, %v728
    %v730 = vpop.f32.mrf.mxu0
    %731 = vdwg.mxu0
    %v732 = vmul.f32 %v729, 0.25
    %v733 = vld [vmem:[%s12] sm:$0x3]
    %v734 = vld [vmem:[%s13] sm:$0xff]
    %vm735 = vcmask 74752
    %v736 = vsel %vm735, %v136, -inf
    %737 = vmax.xlane.f32.xlu0 %v736
    %v738 = vpop.xlane.xlu0 %737
    %v739 = vsub.f32 %v136, %v738
    %v740 = vmul.f32 %v739, 1.442695
    %v741 = vpow.pop %v740
    %v742 = vsel %vm735, %v741, 0.0
    %743 = vadd.xlane.f32.xlu0 %v742
    %v744 = vpop.xlane.xlu0 %743
    %v745 = vlog2.pop %v744
    %v746 = vmul.f32 %v745, 0.6931472
    %v747 = vadd.f32 %v738, %v746
    %748 = vset.pattern.permute.xlu0 0
    %749 = vperm.xlu0 %748, %v733
    %v750 = vpop.permute.xlu0 %749
    %vm751 = vcmp.eq.s32.totalorder %v406, %v750
    %v752 = vsel %vm751, %v136, 0.0
    %v753 = vsel %vm735, %v752, 0.0
    %754 = vadd.xlane.f32.xlu0 %v753
    %v755 = vpop.xlane.xlu0 %754
    %v756 = vsub.f32 %v747, %v755
    %vm757 = vcmask 1041408
    %v758 = vsel %vm757, %v756, 0.0
    %v759 = vrot.slane %v758, 4
    %v760 = vadd.f32 %v758, %v759
    %v761 = vrot.slane %v760, 2
    %v762 = vadd.f32 %v760, %v761
    %v763 = vrot.slane %v762, 1
    %v764 = vadd.f32 %v762, %v763
    %v765 = vmul.f32 %v764, 0.5
    %v766 = vsel %vm735, %v226, -inf
    %767 = vmax.xlane.f32.xlu0 %v766
    %v768 = vpop.xlane.xlu0 %767
    %v769 = vsub.f32 %v226, %v768
    %v770 = vmul.f32 %v769, 1.442695
    %v771 = vpow.pop %v770
    %v772 = vsel %vm735, %v771, 0.0
    %773 = vadd.xlane.f32.xlu0 %v772
    %v774 = vpop.xlane.xlu0 %773
    %v775 = vlog2.pop %v774
    %v776 = vmul.f32 %v775, 0.6931472
    %v777 = vadd.f32 %v768, %v776
    %v778 = vsel %vm751, %v226, 0.0
    %v779 = vsel %vm735, %v778, 0.0
    %780 = vadd.xlane.f32.xlu0 %v779
    %v781 = vpop.xlane.xlu0 %780
    %v782 = vsub.f32 %v777, %v781
    %v783 = vsel %vm757, %v782, 0.0
    %v784 = vrot.slane %v783, 4
    %v785 = vadd.f32 %v783, %v784
    %v786 = vrot.slane %v785, 2
    %v787 = vadd.f32 %v785, %v786
    %v788 = vrot.slane %v787, 1
    %v789 = vadd.f32 %v787, %v788
    %v790 = vmul.f32 %v789, 0.5
    %v791 = vadd.f32 %v765, %v790
    %v792 = vsel %vm513, %v311, -inf
    %793 = vmax.xlane.f32.xlu0 %v792
    %v794 = vpop.xlane.xlu0 %793
    %v795 = vsub.f32 %v311, %v794
    %v796 = vmul.f32 %v795, 1.442695
    %v797 = vpow.pop %v796
    %v798 = vsel %vm513, %v797, 0.0
    %799 = vadd.xlane.f32.xlu0 %v798
    %v800 = vpop.xlane.xlu0 %799
    %v801 = vlog2.pop %v800
    %v802 = vmul.f32 %v801, 0.6931472
    %v803 = vadd.f32 %v794, %v802
    %804 = vset.pattern.permute.xlu0 0
    %805 = vperm.xlu0 %804, %v734
    %v806 = vpop.permute.xlu0 %805
    %vm807 = vcmp.eq.s32.totalorder %v406, %v806
    %v808 = vsel %vm807, %v311, 0.0
    %v809 = vsel %vm513, %v808, 0.0
    %810 = vadd.xlane.f32.xlu0 %v809
    %v811 = vpop.xlane.xlu0 %810
    %v812 = vsub.f32 %v803, %v811
    %v813 = vrot.slane %v812, 4
    %v814 = vadd.f32 %v812, %v813
    %v815 = vrot.slane %v814, 2
    %v816 = vadd.f32 %v814, %v815
    %v817 = vrot.slane %v816, 1
    %v818 = vadd.f32 %v816, %v817
    %v819 = vmul.f32 %v818, 0.125
    %v820 = vsel %vm513, %v400, -inf
    %821 = vmax.xlane.f32.xlu0 %v820
    %v822 = vpop.xlane.xlu0 %821
    %v823 = vsub.f32 %v400, %v822
    %v824 = vmul.f32 %v823, 1.442695
    %v825 = vpow.pop %v824
    %v826 = vsel %vm513, %v825, 0.0
    %827 = vadd.xlane.f32.xlu0 %v826
    %v828 = vpop.xlane.xlu0 %827
    %v829 = vlog2.pop %v828
    %v830 = vmul.f32 %v829, 0.6931472
    %v831 = vadd.f32 %v822, %v830
    %v832 = vsel %vm807, %v400, 0.0
    %v833 = vsel %vm513, %v832, 0.0
    %834 = vadd.xlane.f32.xlu0 %v833
    %v835 = vpop.xlane.xlu0 %834
    %v836 = vsub.f32 %v831, %v835
    %v837 = vrot.slane %v836, 4
    %v838 = vadd.f32 %v836, %v837
    %v839 = vrot.slane %v838, 2
    %v840 = vadd.f32 %v838, %v839
    %v841 = vrot.slane %v840, 1
    %v842 = vadd.f32 %v840, %v841
    %v843 = vmul.f32 %v842, 0.125
    %v844 = vadd.f32 %v819, %v843
    %v845 = vmul.f32 %v136, 0.25
    %v846 = vsel %vm735, %v845, -inf
    %847 = vmax.xlane.f32.xlu0 %v846
    %v848 = vpop.xlane.xlu0 %847
    %v849 = vsub.f32 %v845, %v848
    %v850 = vmul.f32 %v849, 1.442695
    %v851 = vpow.pop %v850
    %v852 = vsel %vm735, %v851, 0.0
    %853 = vadd.xlane.f32.xlu0 %v852
    %v854 = vpop.xlane.xlu0 %853
    %v855 = vlog2.pop %v854
    %v856 = vmul.f32 %v855, 0.6931472
    %v857 = vsub.f32 %v849, %v856
    %v858 = vmul.f32 %v587, 0.25
    %v859 = vsel %vm735, %v858, -inf
    %860 = vmax.xlane.f32.xlu0 %v859
    %v861 = vpop.xlane.xlu0 %860
    %v862 = vsub.f32 %v858, %v861
    %v863 = vmul.f32 %v862, 1.442695
    %v864 = vpow.pop %v863
    %v865 = vsel %vm735, %v864, 0.0
    %866 = vadd.xlane.f32.xlu0 %v865
    %v867 = vpop.xlane.xlu0 %866
    %v868 = vlog2.pop %v867
    %v869 = vmul.f32 %v868, 0.6931472
    %v870 = vsub.f32 %v862, %v869
    %v871 = vmul.f32 %v870, 1.442695
    %v872 = vpow.pop %v871
    %v873 = vsub.f32 %v870, %v857
    %v874 = vmul.f32 %v872, %v873
    %v875 = vsel %vm735, %v874, 0.0
    %876 = vadd.xlane.f32.xlu0 %v875
    %v877 = vpop.xlane.xlu0 %876
    %v878 = vsel %vm757, %v877, 0.0
    %v879 = vrot.slane %v878, 4
    %v880 = vadd.f32 %v878, %v879
    %v881 = vrot.slane %v880, 2
    %v882 = vadd.f32 %v880, %v881
    %v883 = vrot.slane %v882, 1
    %v884 = vadd.f32 %v882, %v883
    %v885 = vmul.f32 %v884, 8.0
    %v886 = vmul.f32 %v226, 0.25
    %v887 = vsel %vm735, %v886, -inf
    %888 = vmax.xlane.f32.xlu0 %v887
    %v889 = vpop.xlane.xlu0 %888
    %v890 = vsub.f32 %v886, %v889
    %v891 = vmul.f32 %v890, 1.442695
    %v892 = vpow.pop %v891
    %v893 = vsel %vm735, %v892, 0.0
    %894 = vadd.xlane.f32.xlu0 %v893
    %v895 = vpop.xlane.xlu0 %894
    %v896 = vlog2.pop %v895
    %v897 = vmul.f32 %v896, 0.6931472
    %v898 = vsub.f32 %v890, %v897
    %v899 = vmul.f32 %v732, 0.25
    %v900 = vsel %vm735, %v899, -inf
    %901 = vmax.xlane.f32.xlu0 %v900
    %v902 = vpop.xlane.xlu0 %901
    %v903 = vsub.f32 %v899, %v902
    %v904 = vmul.f32 %v903, 1.442695
    %v905 = vpow.pop %v904
    %v906 = vsel %vm735, %v905, 0.0
    %907 = vadd.xlane.f32.xlu0 %v906
    %v908 = vpop.xlane.xlu0 %907
    %v909 = vlog2.pop %v908
    %v910 = vmul.f32 %v909, 0.6931472
    %v911 = vsub.f32 %v903, %v910
    %v912 = vmul.f32 %v911, 1.442695
    %v913 = vpow.pop %v912
    %v914 = vsub.f32 %v911, %v898
    %v915 = vmul.f32 %v913, %v914
    %v916 = vsel %vm735, %v915, 0.0
    %917 = vadd.xlane.f32.xlu0 %v916
    %v918 = vpop.xlane.xlu0 %917
    %v919 = vsel %vm757, %v918, 0.0
    %v920 = vrot.slane %v919, 4
    %v921 = vadd.f32 %v919, %v920
    %v922 = vrot.slane %v921, 2
    %v923 = vadd.f32 %v921, %v922
    %v924 = vrot.slane %v923, 1
    %v925 = vadd.f32 %v923, %v924
    %v926 = vmul.f32 %v925, 8.0
    %v927 = vadd.f32 %v885, %v926
    %928 = vst.msk [vmem:[%s14] sm:$0x3] %vm735, %v136
    %929 = vst.msk [vmem:[%s15] sm:$0x3] %vm735, %v226
    %930 = vst.msk [vmem:[%s16] sm:$0x3] %vm735, %v587
    %931 = vst.msk [vmem:[%s17] sm:$0x3] %vm735, %v732
    %v932 = vadd.f32 %v791, %v844
    %v933 = vadd.f32 %v932, %v927
    %vm934 = vcmask 0
    %935 = vst.msk [vmem:[#allocation2] sm:$0x1] %vm934, %v933
    // Predicated region
    $region58: #{_lambda_.3} parent=1 // pred_check
      _
    $region59: #{_lambda_.3} parent=1 // pred_check_branch
      %937 = sbr.rel (0) target = $region61
    $region60: #{_lambda_.3} parent=1 // pred_region
      _
    $region61: #{_lambda_.3} parent=1 // pred_fallthru
      _
    // Predicated region
    $region62: #{_lambda_.3} parent=1 // pred_check
      _
    $region63: #{_lambda_.3} parent=1 // pred_check_branch
      %939 = sbr.rel (0) target = $region65
    $region64: #{_lambda_.3} parent=1 // pred_region
      _
    $region65: #{_lambda_.3} parent=1 // pred_fallthru
      _
    // Predicated region
    $region66: #{_lambda_.3} parent=1 // pred_check
      _
    $region67: #{_lambda_.3} parent=1 // pred_check_branch
      %941 = sbr.rel (0) target = $region69
    $region68: #{_lambda_.3} parent=1 // pred_region
      _
    $region69: #{_lambda_.3} parent=1 // pred_fallthru
      _
    // Predicated region
    $region70: #{_lambda_.3} parent=1 // pred_check
      _
    $region71: #{_lambda_.3} parent=1 // pred_check_branch
      %943 = sbr.rel (0) target = $region73
    $region72: #{_lambda_.3} parent=1 // pred_region
      _
    $region73: #{_lambda_.3} parent=1 // pred_fallthru
      _
    // Predicated region
    $region74: #{_lambda_.3} parent=1 // pred_check
      _
    $region75: #{_lambda_.3} parent=1 // pred_check_branch
      %945 = sbr.rel (0) target = $region77
    $region76: #{_lambda_.3} parent=1 // pred_region
      %s947 = ssub.s32 16, 16
      %948 = vsyncadd [#allocation3], %s947
      %s950 = sshll.u32 [#allocation2], 4
      %s951 = int_to_ptr.vmem [resolvable:$true] %s950
      %953 = dma.vmem_to_hbm [thread:$0]  %s951, 16, %s18, [#allocation3]
    $region77: #{_lambda_.3} parent=1 // pred_fallthru
      _
    // Predicated region
    $region78: #{_lambda_.3} parent=1 // pred_check
      _
    $region79: #{_lambda_.3} parent=1 // pred_check_branch
      %955 = sbr.rel (0) target = $region81
    $region80: #{_lambda_.3} parent=1 // pred_region
      _
    $region81: #{_lambda_.3} parent=1 // pred_fallthru
      _
    // Predicated region
    $region82: #{_lambda_.3} parent=1 // pred_check
      _
    $region83: #{_lambda_.3} parent=1 // pred_check_branch
      %957 = sbr.rel (0) target = $region85
    $region84: #{_lambda_.3} parent=1 // pred_region
      _
    $region85: #{_lambda_.3} parent=1 // pred_fallthru
      _
    // Predicated region
    $region86: #{_lambda_.3} parent=1 // pred_check
      _
    $region87: #{_lambda_.3} parent=1 // pred_check_branch
      %959 = sbr.rel (0) target = $region89
    $region88: #{_lambda_.3} parent=1 // pred_region
      _
    $region89: #{_lambda_.3} parent=1 // pred_fallthru
      _
    // Predicated region
    $region90: #{_lambda_.3} parent=1 // pred_check
      _
    $region91: #{_lambda_.3} parent=1 // pred_check_branch
      %961 = sbr.rel (0) target = $region93
    $region92: #{_lambda_.3} parent=1 // pred_region
      _
    $region93: #{_lambda_.3} parent=1 // pred_fallthru
      _
    // Predicated region
    $region94: #{_lambda_.3} parent=1 // pred_check
      _
    $region95: #{_lambda_.3} parent=1 // pred_check_branch
      %963 = sbr.rel (0) target = $region97
    $region96: #{_lambda_.3} parent=1 // pred_region
      %964 = dma.done [#allocation3], 16
    $region97: #{_lambda_.3} parent=1 // pred_fallthru
      _
    %965 = vsyncpa [#allocation3], 1

</llo_original>
